<compile_context>
chip_gen: v6e
topology: v6e:2x2x1
jax: 0.10.0
libtpu: 0.0.40
codegen_flags: <defaults>
</compile_context>

<pallas_src>
import math
import functools
import numpy as np

import jax
import jax.numpy as jnp
from jax import lax
from jax.experimental import pallas as pl
from jax.experimental.pallas import tpu as pltpu

OPT = dict(
    hidden_size=32,
    multihead=4,
    dropout=0.1,        # eval mode -> identity
    orders=3,
    ORDERS=[0, 1, 2],
    IMG_SCALE=4,
    routing='soft',
    pooling='avg',
    BINARIZE=False,
)
NEG_INF = -1e9


# ----------------------------- fused kernel ---------------------------------
def _sar_fused_kernel(v_ref, k_ref, q_ref, bias_ref,
                      wqkv_ref, bqkv_ref, wm_ref, bm_ref,
                      wr1_ref, wr2_ref, br2_ref,
                      o_ref, *, nh, dh, n_ord, inv_sqrt_dk):
    H = nh * dh
    v_in = v_ref[0]            # (Lv, H)
    k_in = k_ref[0]            # (Lk, H)
    q_in = q_ref[0]            # (Lq, H)
    bias = bias_ref[0]         # (n_ord, Lq, Lk) additive mask bias (0 / -1e9)

    # --- SoftRoutingBlock, pooling='avg' (eval: plain softmax, no gumbel) ---
    pooled = jnp.mean(v_in, axis=0, keepdims=True)                      # (1, H)
    hmid = jnp.maximum(
        jnp.dot(pooled, wr1_ref[...], preferred_element_type=jnp.float32), 0.0)
    logits = jnp.dot(hmid, wr2_ref[...],
                     preferred_element_type=jnp.float32) + br2_ref[...]  # (1, n_ord)
    logits = logits - jnp.max(logits, axis=-1, keepdims=True)
    e = jnp.exp(logits)
    alpha = e / jnp.sum(e, axis=-1, keepdims=True)                       # (1, n_ord)
    # BINARIZE=False -> no argmax binarization.

    # --- Q/K/V projections from one concatenated weight [v | k | q] ---------
    vp = jnp.dot(v_in, wqkv_ref[:, 0:H],
                 preferred_element_type=jnp.float32) + bqkv_ref[:, 0:H]
    kp = jnp.dot(k_in, wqkv_ref[:, H:2 * H],
                 preferred_element_type=jnp.float32) + bqkv_ref[:, H:2 * H]
    qp = jnp.dot(q_in, wqkv_ref[:, 2 * H:3 * H],
                 preferred_element_type=jnp.float32) + bqkv_ref[:, 2 * H:3 * H]

    Lq = qp.shape[0]
    proj = jnp.zeros((Lq, H), jnp.float32)

    # --- routed attention, static unroll over heads (nh=4) ------------------
    for h in range(nh):
        lo, hi = h * dh, (h + 1) * dh
        qh = qp[:, lo:hi]                                   # (Lq, dh)
        kh = kp[:, lo:hi]                                   # (Lk, dh)
        vh = vp[:, lo:hi]                                   # (Lk, dh)

        s = lax.dot_general(qh, kh, (((1,), (1,)), ((), ())),
                            preferred_element_type=jnp.float32) * inv_sqrt_dk
        # batched softmax over all routing orders at once: (n_ord, Lq, Lk)
        # NOTE: additive -1e9 bias == masked_fill for any row with >=1
        # unmasked key (masked entries underflow to exactly 0 after exp).
        S = s[None, :, :] + bias
        S = S - jnp.max(S, axis=-1, keepdims=True)
        P = jnp.exp(S)
        P = P / jnp.sum(P, axis=-1, keepdims=True)
        # dropout on att maps: eval mode -> identity.

        att = jnp.zeros_like(s)
        for i in range(n_ord):                              # einsum('bl,blcnm->bcnm')
            att = att + alpha[:, i:i + 1] * P[i]

        oh = jnp.dot(att, vh, preferred_element_type=jnp.float32)   # (Lq, dh)
        # fused head-merge + linear_merge: merged @ W_m == sum_h oh @ W_m[h*dh:(h+1)*dh]
        proj = proj + jnp.dot(oh, wm_ref[lo:hi, :],
                              preferred_element_type=jnp.float32)

    o_ref[0] = proj + bm_ref[...]


def sa_routing_block(params, v, k, q, mask_bias, tau=None, training=False):
    """SARoutingBlock.forward (routing='soft', pooling='avg', BINARIZE=False,
    eval mode -> `tau` / `training` unused).  mask_bias: (B, n_ord, Lq, Lk)
    additive float32 bias precomputed on the host."""
    B, Lq, H = q.shape
    Lv = v.shape[1]
    Lk = k.shape[1]
    n_ord = mask_bias.shape[1]
    nh = OPT['multihead']
    dh = H // nh

    kernel = functools.partial(_sar_fused_kernel, nh=nh, dh=dh, n_ord=n_ord,
                               inv_sqrt_dk=1.0 / math.sqrt(dh))
    return pl.pallas_call(
        kernel,
        out_shape=jax.ShapeDtypeStruct((B, Lq, H), jnp.float32),
        grid=(B,),
        in_specs=[
            pl.BlockSpec((1, Lv, H), lambda b: (b, 0, 0)),            # v
            pl.BlockSpec((1, Lk, H), lambda b: (b, 0, 0)),            # k
            pl.BlockSpec((1, Lq, H), lambda b: (b, 0, 0)),            # q
            pl.BlockSpec((1, n_ord, Lq, Lk), lambda b: (b, 0, 0, 0)), # mask bias
            pl.BlockSpec((H, 3 * H), lambda b: (0, 0)),               # W_qkv
            pl.BlockSpec((1, 3 * H), lambda b: (0, 0)),               # b_qkv
            pl.BlockSpec((H, H), lambda b: (0, 0)),                   # W_merge
            pl.BlockSpec((1, H), lambda b: (0, 0)),                   # b_merge
            pl.BlockSpec((H, H // 2), lambda b: (0, 0)),              # routing r1 (no bias)
            pl.BlockSpec((H // 2, n_ord), lambda b: (0, 0)),          # routing r2
            pl.BlockSpec((1, n_ord), lambda b: (0, 0)),               # routing r2 bias
        ],
        out_specs=pl.BlockSpec((1, Lq, H), lambda b: (b, 0, 0)),
        compiler_params=pltpu.CompilerParams(dimension_semantics=("parallel",)),
    )(v, k, q, mask_bias,
      params['w_qkv'], params['b_qkv'], params['w_m'], params['b_m'],
      params['w_r1'], params['w_r2'], params['b_r2'])


# ----------------------------- host-side mask build --------------------------
def get_img_masks(scale, order):
    masks = []
    for i in range(scale):
        for j in range(scale):
            m = np.ones([scale, scale], dtype=np.float32)
            for x in range(i - order, i + order + 1):
                for y in range(j - order, j + order + 1):
                    if 0 <= x < scale and 0 <= y < scale:
                        m[x][y] = 0
            masks.append(m.reshape(scale * scale))
    return np.asarray(masks, dtype=bool)


def build_routing_mask_bias(x_pad_mask, Lq, opt):
    """x_pad_mask: (B, Lk) bool key-padding mask (True = masked).
    Returns an additive float32 bias (B, n_orders, Lq, Lk) with 0 / -1e9.
    Precomputed once on the host (hoisted out of the forward path)."""
    B, Lk = x_pad_mask.shape
    s2 = opt['IMG_SCALE'] ** 2
    per_order = []
    for order in opt['ORDERS']:
        if order == 0:
            m = np.broadcast_to(x_pad_mask[:, None, :], (B, Lq, Lk))
        else:
            mimg = get_img_masks(opt['IMG_SCALE'], order)                 # (s2, s2)
            reps = Lq // s2
            rows = np.concatenate([mimg] * reps + [mimg[:Lq % s2, :]], axis=0)
            m = np.logical_or(x_pad_mask[:, None, :], rows[None, :, :])
        per_order.append(m)
    mask = np.stack(per_order, axis=1).astype(np.float32)                 # (B,n_ord,Lq,Lk)
    return jnp.asarray(mask * np.float32(NEG_INF))


# ----------------------------- params & reference ----------------------------
def init_params(key, H, n_ord):
    ks = jax.random.split(key, 9)

    def w(kk, din, dout):
        return jax.random.normal(kk, (din, dout), jnp.float32) / math.sqrt(din)

    return dict(
        # concatenated [W_v | W_k | W_q]
        w_qkv=jnp.concatenate([w(ks[0], H, H), w(ks[1], H, H), w(ks[2], H, H)], axis=1),
        b_qkv=0.01 * jax.random.normal(ks[3], (1, 3 * H), jnp.float32),
        w_m=w(ks[4], H, H),
        b_m=0.01 * jax.random.normal(ks[5], (1, H), jnp.float32),
        w_r1=w(ks[6], H, H // 2),                       # nn.Linear(H, H//2, bias=False)
        w_r2=w(ks[7], H // 2, n_ord),                   # nn.Linear(H//2, orders)
        b_r2=0.01 * jax.random.normal(ks[8], (1, n_ord), jnp.float32),
    )


def ref_forward_np(params, v, k, q, bias, nh):
    """Pure numpy float64 reference of SARoutingBlock forward (soft/avg/eval)."""
    f64 = lambda a: np.asarray(a, dtype=np.float64)
    v, k, q, bias = map(f64, (v, k, q, bias))
    W, bqkv = f64(params['w_qkv']), f64(params['b_qkv'])
    wm, bm = f64(params['w_m']), f64(params['b_m'])
    wr1, wr2, br2 = f64(params['w_r1']), f64(params['w_r2']), f64(params['b_r2'])
    B, Lq, H = q.shape
    dh = H // nh

    def softmax(x, axis):
        x = x - x.max(axis=axis, keepdims=True)
        e = np.exp(x)
        return e / e.sum(axis=axis, keepdims=True)

    pooled = v.mean(axis=1)
    alphas = softmax(np.maximum(pooled @ wr1, 0.0) @ wr2 + br2, -1)

    def heads(x, Wp, bp):
        y = x @ Wp + bp
        return y.reshape(B, -1, nh, dh).transpose(0, 2, 1, 3)

    vp = heads(v, W[:, :H], bqkv[:, :H])
    kp = heads(k, W[:, H:2 * H], bqkv[:, H:2 * H])
    qp = heads(q, W[:, 2 * H:], bqkv[:, 2 * H:])
    scores = qp @ kp.transpose(0, 1, 3, 2) / math.sqrt(dh)
    att = np.zeros_like(scores)
    for o in range(bias.shape[1]):
        att += alphas[:, o][:, None, None, None] * softmax(scores + bias[:, o][:, None], -1)
    out = att @ vp
    out = out.transpose(0, 2, 1, 3).reshape(B, Lq, H)
    return out @ wm + bm


# ----------------------------- main ------------------------------------------
if __name__ == "__main__":
    H = OPT['hidden_size']
    NH = OPT['multihead']
    n_ord = OPT['orders']
    B = 2
    Lx = OPT['IMG_SCALE'] ** 2      # 16 image-grid keys (v, k)
    Lq = 16                         # text queries (q)

    key = jax.random.PRNGKey(0)
    kparams, kx, ky = jax.random.split(key, 3)
    params = init_params(kparams, H, n_ord)

    x_img = jax.random.normal(kx, (B, Lx, H), jnp.float32)   # image feats -> v, k
    y_txt = jax.random.normal(ky, (B, Lq, H), jnp.float32)   # text feats  -> q

    # Host-precomputed masks (built ONCE, outside the forward); no row is
    # fully masked, so additive -1e9 bias == PyTorch masked_fill exactly.
    x_pad = np.zeros((B, Lx), dtype=bool)
    x_pad[1, -2:] = True
    mask_bias = build_routing_mask_bias(x_pad, Lq, OPT)      # (B, n_ord, Lq, Lx)

    fwd = jax.jit(sa_routing_block)
    out = fwd(params, x_img, x_img, y_txt, mask_bias)
    jax.block_until_ready(out)

    out_np = np.asarray(out)
    assert out_np.shape == (B, Lq, H)
    assert np.all(np.isfinite(out_np))

    ref = ref_forward_np(params, x_img, x_img, y_txt, mask_bias, NH)
    max_err = float(np.max(np.abs(out_np - ref)))
    assert max_err < 2e-2, f"max abs err vs reference: {max_err}"

    print("KERNEL_OK")
</pallas_src>

<mosaic_0001>
module attributes {stable_mosaic.version = 11 : i64} {
  func.func @_sar_fused_kernel(%arg0: i32, %arg1: memref<1x16x32xf32, #tpu.memory_space<vmem>>, %arg2: memref<1x16x32xf32, #tpu.memory_space<vmem>>, %arg3: memref<1x16x32xf32, #tpu.memory_space<vmem>>, %arg4: memref<1x3x16x16xf32, #tpu.memory_space<vmem>>, %arg5: memref<32x96xf32, #tpu.memory_space<vmem>>, %arg6: memref<1x96xf32, #tpu.memory_space<vmem>>, %arg7: memref<32x32xf32, #tpu.memory_space<vmem>>, %arg8: memref<1x32xf32, #tpu.memory_space<vmem>>, %arg9: memref<32x16xf32, #tpu.memory_space<vmem>>, %arg10: memref<16x3xf32, #tpu.memory_space<vmem>>, %arg11: memref<1x3xf32, #tpu.memory_space<vmem>>, %arg12: memref<1x16x32xf32, #tpu.memory_space<vmem>>) attributes {dimension_semantics = [#tpu.dimension_semantics<parallel>], iteration_bounds = array<i64: 2>, scalar_prefetch = 0 : i64, scratch_operands = 0 : i64, tpu.core_type = #tpu.core_type<tc>, window_params = [{transform_indices = @transform_0, window_bounds = array<i64: 1, 16, 32>}, {transform_indices = @transform_1, window_bounds = array<i64: 1, 16, 32>}, {transform_indices = @transform_2, window_bounds = array<i64: 1, 16, 32>}, {transform_indices = @transform_3, window_bounds = array<i64: 1, 3, 16, 16>}, {pipeline_mode = #tpu.pipeline_mode<synchronous>, transform_indices = @transform_4, window_bounds = array<i64: 32, 96>}, {pipeline_mode = #tpu.pipeline_mode<synchronous>, transform_indices = @transform_5, window_bounds = array<i64: 1, 96>}, {pipeline_mode = #tpu.pipeline_mode<synchronous>, transform_indices = @transform_6, window_bounds = array<i64: 32, 32>}, {pipeline_mode = #tpu.pipeline_mode<synchronous>, transform_indices = @transform_7, window_bounds = array<i64: 1, 32>}, {pipeline_mode = #tpu.pipeline_mode<synchronous>, transform_indices = @transform_8, window_bounds = array<i64: 32, 16>}, {pipeline_mode = #tpu.pipeline_mode<synchronous>, transform_indices = @transform_9, window_bounds = array<i64: 16, 3>}, {pipeline_mode = #tpu.pipeline_mode<synchronous>, transform_indices = @transform_10, window_bounds = array<i64: 1, 3>}, {transform_indices = @transform_11, window_bounds = array<i64: 1, 16, 32>}]} {
    %c0 = arith.constant 0 : index
    %c0_0 = arith.constant 0 : index
    %c0_1 = arith.constant 0 : index
    %0 = vector.load %arg1[%c0, %c0_0, %c0_1] : memref<1x16x32xf32, #tpu.memory_space<vmem>>, vector<1x16x32xf32>
    %1 = vector.shape_cast %0 : vector<1x16x32xf32> to vector<16x32xf32>
    %c0_2 = arith.constant 0 : index
    %c0_3 = arith.constant 0 : index
    %c0_4 = arith.constant 0 : index
    %2 = vector.load %arg2[%c0_2, %c0_3, %c0_4] : memref<1x16x32xf32, #tpu.memory_space<vmem>>, vector<1x16x32xf32>
    %3 = vector.shape_cast %2 : vector<1x16x32xf32> to vector<16x32xf32>
    %c0_5 = arith.constant 0 : index
    %c0_6 = arith.constant 0 : index
    %c0_7 = arith.constant 0 : index
    %4 = vector.load %arg3[%c0_5, %c0_6, %c0_7] : memref<1x16x32xf32, #tpu.memory_space<vmem>>, vector<1x16x32xf32>
    %5 = vector.shape_cast %4 : vector<1x16x32xf32> to vector<16x32xf32>
    %c0_8 = arith.constant 0 : index
    %c0_9 = arith.constant 0 : index
    %c0_10 = arith.constant 0 : index
    %c0_11 = arith.constant 0 : index
    %6 = vector.load %arg4[%c0_8, %c0_9, %c0_10, %c0_11] : memref<1x3x16x16xf32, #tpu.memory_space<vmem>>, vector<1x3x16x16xf32>
    %7 = vector.shape_cast %6 : vector<1x3x16x16xf32> to vector<3x16x16xf32>
    %cst = arith.constant dense<0.000000e+00> : vector<32xf32>
    %8 = vector.multi_reduction <add>, %1, %cst [0] : vector<16x32xf32> to vector<32xf32>
    %9 = vector.shape_cast %8 : vector<32xf32> to vector<1x32xf32>
    %cst_12 = arith.constant 1.600000e+01 : f32
    %10 = vector.broadcast %cst_12 : f32 to vector<1x32xf32>
    %11 = arith.divf %9, %10 : vector<1x32xf32>
    %c0_13 = arith.constant 0 : index
    %c0_14 = arith.constant 0 : index
    %12 = vector.load %arg9[%c0_13, %c0_14] : memref<32x16xf32, #tpu.memory_space<vmem>>, vector<32x16xf32>
    %cst_15 = arith.constant dense<0.000000e+00> : vector<1x16xf32>
    %13 = tpu.matmul %11, %12, %cst_15 {dimension_numbers = #tpu.dot_dimension_numbers<[1], [0], [0], [1], [0, 0, 1, 1], [], []>} : vector<1x32xf32>, vector<32x16xf32>, vector<1x16xf32> -> vector<1x16xf32>
    %cst_16 = arith.constant 0.000000e+00 : f32
    %14 = vector.broadcast %cst_16 : f32 to vector<1x16xf32>
    %15 = arith.maximumf %13, %14 : vector<1x16xf32>
    %c0_17 = arith.constant 0 : index
    %c0_18 = arith.constant 0 : index
    %16 = vector.load %arg10[%c0_17, %c0_18] : memref<16x3xf32, #tpu.memory_space<vmem>>, vector<16x3xf32>
    %cst_19 = arith.constant dense<0.000000e+00> : vector<1x3xf32>
    %17 = tpu.matmul %15, %16, %cst_19 {dimension_numbers = #tpu.dot_dimension_numbers<[1], [0], [0], [1], [0, 0, 1, 1], [], []>} : vector<1x16xf32>, vector<16x3xf32>, vector<1x3xf32> -> vector<1x3xf32>
    %c0_20 = arith.constant 0 : index
    %c0_21 = arith.constant 0 : index
    %18 = vector.load %arg11[%c0_20, %c0_21] : memref<1x3xf32, #tpu.memory_space<vmem>>, vector<1x3xf32>
    %19 = arith.addf %17, %18 : vector<1x3xf32>
    %cst_22 = arith.constant dense<0xFF800000> : vector<1xf32>
    %20 = vector.multi_reduction <maximumf>, %19, %cst_22 [1] : vector<1x3xf32> to vector<1xf32>
    %21 = vector.shape_cast %20 : vector<1xf32> to vector<1x1xf32>
    %22 = vector.broadcast %21 : vector<1x1xf32> to vector<1x3xf32>
    %23 = arith.subf %19, %22 : vector<1x3xf32>
    %24 = math.exp %23 : vector<1x3xf32>
    %cst_23 = arith.constant dense<0.000000e+00> : vector<1xf32>
    %25 = vector.multi_reduction <add>, %24, %cst_23 [1] : vector<1x3xf32> to vector<1xf32>
    %26 = vector.shape_cast %25 : vector<1xf32> to vector<1x1xf32>
    %27 = vector.broadcast %26 : vector<1x1xf32> to vector<1x3xf32>
    %28 = arith.divf %24, %27 : vector<1x3xf32>
    %c0_24 = arith.constant 0 : index
    %c0_25 = arith.constant 0 : index
    %29 = vector.load %arg5[%c0_24, %c0_25] : memref<32x96xf32, #tpu.memory_space<vmem>>, vector<32x32xf32>
    %cst_26 = arith.constant dense<0.000000e+00> : vector<16x32xf32>
    %30 = tpu.matmul %1, %29, %cst_26 {dimension_numbers = #tpu.dot_dimension_numbers<[1], [0], [0], [1], [0, 0, 1, 1], [], []>} : vector<16x32xf32>, vector<32x32xf32>, vector<16x32xf32> -> vector<16x32xf32>
    %c0_27 = arith.constant 0 : index
    %c0_28 = arith.constant 0 : index
    %31 = vector.load %arg6[%c0_27, %c0_28] : memref<1x96xf32, #tpu.memory_space<vmem>>, vector<1x32xf32>
    %32 = vector.broadcast %31 : vector<1x32xf32> to vector<16x32xf32>
    %33 = arith.addf %30, %32 : vector<16x32xf32>
    %c0_29 = arith.constant 0 : index
    %c32 = arith.constant 32 : index
    %34 = vector.load %arg5[%c0_29, %c32] : memref<32x96xf32, #tpu.memory_space<vmem>>, vector<32x32xf32>
    %cst_30 = arith.constant dense<0.000000e+00> : vector<16x32xf32>
    %35 = tpu.matmul %3, %34, %cst_30 {dimension_numbers = #tpu.dot_dimension_numbers<[1], [0], [0], [1], [0, 0, 1, 1], [], []>} : vector<16x32xf32>, vector<32x32xf32>, vector<16x32xf32> -> vector<16x32xf32>
    %c0_31 = arith.constant 0 : index
    %c32_32 = arith.constant 32 : index
    %36 = vector.load %arg6[%c0_31, %c32_32] : memref<1x96xf32, #tpu.memory_space<vmem>>, vector<1x32xf32>
    %37 = vector.broadcast %36 : vector<1x32xf32> to vector<16x32xf32>
    %38 = arith.addf %35, %37 : vector<16x32xf32>
    %c0_33 = arith.constant 0 : index
    %c64 = arith.constant 64 : index
    %39 = vector.load %arg5[%c0_33, %c64] : memref<32x96xf32, #tpu.memory_space<vmem>>, vector<32x32xf32>
    %cst_34 = arith.constant dense<0.000000e+00> : vector<16x32xf32>
    %40 = tpu.matmul %5, %39, %cst_34 {dimension_numbers = #tpu.dot_dimension_numbers<[1], [0], [0], [1], [0, 0, 1, 1], [], []>} : vector<16x32xf32>, vector<32x32xf32>, vector<16x32xf32> -> vector<16x32xf32>
    %c0_35 = arith.constant 0 : index
    %c64_36 = arith.constant 64 : index
    %41 = vector.load %arg6[%c0_35, %c64_36] : memref<1x96xf32, #tpu.memory_space<vmem>>, vector<1x32xf32>
    %42 = vector.broadcast %41 : vector<1x32xf32> to vector<16x32xf32>
    %43 = arith.addf %40, %42 : vector<16x32xf32>
    %cst_37 = arith.constant 0.000000e+00 : f32
    %44 = vector.broadcast %cst_37 : f32 to vector<16x32xf32>
    %45 = vector.extract_strided_slice %43 {offsets = [0, 0], sizes = [16, 8], strides = [1, 1]} : vector<16x32xf32> to vector<16x8xf32>
    %46 = vector.extract_strided_slice %38 {offsets = [0, 0], sizes = [16, 8], strides = [1, 1]} : vector<16x32xf32> to vector<16x8xf32>
    %47 = vector.extract_strided_slice %33 {offsets = [0, 0], sizes = [16, 8], strides = [1, 1]} : vector<16x32xf32> to vector<16x8xf32>
    %cst_38 = arith.constant dense<0.000000e+00> : vector<16x16xf32>
    %48 = tpu.matmul %45, %46, %cst_38 {dimension_numbers = #tpu.dot_dimension_numbers<[1], [1], [0], [0], [0, 0, 1, 0], [], []>} : vector<16x8xf32>, vector<16x8xf32>, vector<16x16xf32> -> vector<16x16xf32>
    %cst_39 = arith.constant 0.353553385 : f32
    %49 = vector.broadcast %cst_39 : f32 to vector<16x16xf32>
    %50 = arith.mulf %48, %49 : vector<16x16xf32>
    %51 = vector.shape_cast %50 : vector<16x16xf32> to vector<1x16x16xf32>
    %52 = vector.broadcast %51 : vector<1x16x16xf32> to vector<3x16x16xf32>
    %53 = arith.addf %52, %7 : vector<3x16x16xf32>
    %cst_40 = arith.constant dense<0xFF800000> : vector<3x16xf32>
    %54 = vector.multi_reduction <maximumf>, %53, %cst_40 [2] : vector<3x16x16xf32> to vector<3x16xf32>
    %55 = vector.shape_cast %54 : vector<3x16xf32> to vector<3x16x1xf32>
    %56 = vector.broadcast %55 : vector<3x16x1xf32> to vector<3x16x16xf32>
    %57 = arith.subf %53, %56 : vector<3x16x16xf32>
    %58 = math.exp %57 : vector<3x16x16xf32>
    %cst_41 = arith.constant dense<0.000000e+00> : vector<3x16xf32>
    %59 = vector.multi_reduction <add>, %58, %cst_41 [2] : vector<3x16x16xf32> to vector<3x16xf32>
    %60 = vector.shape_cast %59 : vector<3x16xf32> to vector<3x16x1xf32>
    %61 = vector.broadcast %60 : vector<3x16x1xf32> to vector<3x16x16xf32>
    %62 = arith.divf %58, %61 : vector<3x16x16xf32>
    %cst_42 = arith.constant 0.000000e+00 : f32
    %63 = vector.broadcast %cst_42 : f32 to vector<16x16xf32>
    %64 = vector.extract_strided_slice %28 {offsets = [0, 0], sizes = [1, 1], strides = [1, 1]} : vector<1x3xf32> to vector<1x1xf32>
    %65 = vector.extract_strided_slice %62 {offsets = [0, 0, 0], sizes = [1, 16, 16], strides = [1, 1, 1]} : vector<3x16x16xf32> to vector<1x16x16xf32>
    %66 = vector.shape_cast %65 : vector<1x16x16xf32> to vector<16x16xf32>
    %67 = vector.broadcast %64 : vector<1x1xf32> to vector<16x16xf32>
    %68 = arith.mulf %67, %66 : vector<16x16xf32>
    %69 = arith.addf %63, %68 : vector<16x16xf32>
    %70 = vector.extract_strided_slice %28 {offsets = [0, 1], sizes = [1, 1], strides = [1, 1]} : vector<1x3xf32> to vector<1x1xf32>
    %71 = vector.extract_strided_slice %62 {offsets = [1, 0, 0], sizes = [1, 16, 16], strides = [1, 1, 1]} : vector<3x16x16xf32> to vector<1x16x16xf32>
    %72 = vector.shape_cast %71 : vector<1x16x16xf32> to vector<16x16xf32>
    %73 = vector.broadcast %70 : vector<1x1xf32> to vector<16x16xf32>
    %74 = arith.mulf %73, %72 : vector<16x16xf32>
    %75 = arith.addf %69, %74 : vector<16x16xf32>
    %76 = vector.extract_strided_slice %28 {offsets = [0, 2], sizes = [1, 1], strides = [1, 1]} : vector<1x3xf32> to vector<1x1xf32>
    %77 = vector.extract_strided_slice %62 {offsets = [2, 0, 0], sizes = [1, 16, 16], strides = [1, 1, 1]} : vector<3x16x16xf32> to vector<1x16x16xf32>
    %78 = vector.shape_cast %77 : vector<1x16x16xf32> to vector<16x16xf32>
    %79 = vector.broadcast %76 : vector<1x1xf32> to vector<16x16xf32>
    %80 = arith.mulf %79, %78 : vector<16x16xf32>
    %81 = arith.addf %75, %80 : vector<16x16xf32>
    %cst_43 = arith.constant dense<0.000000e+00> : vector<16x8xf32>
    %82 = tpu.matmul %81, %47, %cst_43 {dimension_numbers = #tpu.dot_dimension_numbers<[1], [0], [0], [1], [0, 0, 1, 1], [], []>} : vector<16x16xf32>, vector<16x8xf32>, vector<16x8xf32> -> vector<16x8xf32>
    %c0_44 = arith.constant 0 : index
    %c0_45 = arith.constant 0 : index
    %83 = vector.load %arg7[%c0_44, %c0_45] : memref<32x32xf32, #tpu.memory_space<vmem>>, vector<8x32xf32>
    %cst_46 = arith.constant dense<0.000000e+00> : vector<16x32xf32>
    %84 = tpu.matmul %82, %83, %cst_46 {dimension_numbers = #tpu.dot_dimension_numbers<[1], [0], [0], [1], [0, 0, 1, 1], [], []>} : vector<16x8xf32>, vector<8x32xf32>, vector<16x32xf32> -> vector<16x32xf32>
    %85 = arith.addf %44, %84 : vector<16x32xf32>
    %86 = vector.extract_strided_slice %43 {offsets = [0, 8], sizes = [16, 8], strides = [1, 1]} : vector<16x32xf32> to vector<16x8xf32>
    %87 = vector.extract_strided_slice %38 {offsets = [0, 8], sizes = [16, 8], strides = [1, 1]} : vector<16x32xf32> to vector<16x8xf32>
    %88 = vector.extract_strided_slice %33 {offsets = [0, 8], sizes = [16, 8], strides = [1, 1]} : vector<16x32xf32> to vector<16x8xf32>
    %cst_47 = arith.constant dense<0.000000e+00> : vector<16x16xf32>
    %89 = tpu.matmul %86, %87, %cst_47 {dimension_numbers = #tpu.dot_dimension_numbers<[1], [1], [0], [0], [0, 0, 1, 0], [], []>} : vector<16x8xf32>, vector<16x8xf32>, vector<16x16xf32> -> vector<16x16xf32>
    %cst_48 = arith.constant 0.353553385 : f32
    %90 = vector.broadcast %cst_48 : f32 to vector<16x16xf32>
    %91 = arith.mulf %89, %90 : vector<16x16xf32>
    %92 = vector.shape_cast %91 : vector<16x16xf32> to vector<1x16x16xf32>
    %93 = vector.broadcast %92 : vector<1x16x16xf32> to vector<3x16x16xf32>
    %94 = arith.addf %93, %7 : vector<3x16x16xf32>
    %cst_49 = arith.constant dense<0xFF800000> : vector<3x16xf32>
    %95 = vector.multi_reduction <maximumf>, %94, %cst_49 [2] : vector<3x16x16xf32> to vector<3x16xf32>
    %96 = vector.shape_cast %95 : vector<3x16xf32> to vector<3x16x1xf32>
    %97 = vector.broadcast %96 : vector<3x16x1xf32> to vector<3x16x16xf32>
    %98 = arith.subf %94, %97 : vector<3x16x16xf32>
    %99 = math.exp %98 : vector<3x16x16xf32>
    %cst_50 = arith.constant dense<0.000000e+00> : vector<3x16xf32>
    %100 = vector.multi_reduction <add>, %99, %cst_50 [2] : vector<3x16x16xf32> to vector<3x16xf32>
    %101 = vector.shape_cast %100 : vector<3x16xf32> to vector<3x16x1xf32>
    %102 = vector.broadcast %101 : vector<3x16x1xf32> to vector<3x16x16xf32>
    %103 = arith.divf %99, %102 : vector<3x16x16xf32>
    %cst_51 = arith.constant 0.000000e+00 : f32
    %104 = vector.broadcast %cst_51 : f32 to vector<16x16xf32>
    %105 = vector.extract_strided_slice %28 {offsets = [0, 0], sizes = [1, 1], strides = [1, 1]} : vector<1x3xf32> to vector<1x1xf32>
    %106 = vector.extract_strided_slice %103 {offsets = [0, 0, 0], sizes = [1, 16, 16], strides = [1, 1, 1]} : vector<3x16x16xf32> to vector<1x16x16xf32>
    %107 = vector.shape_cast %106 : vector<1x16x16xf32> to vector<16x16xf32>
    %108 = vector.broadcast %105 : vector<1x1xf32> to vector<16x16xf32>
    %109 = arith.mulf %108, %107 : vector<16x16xf32>
    %110 = arith.addf %104, %109 : vector<16x16xf32>
    %111 = vector.extract_strided_slice %28 {offsets = [0, 1], sizes = [1, 1], strides = [1, 1]} : vector<1x3xf32> to vector<1x1xf32>
    %112 = vector.extract_strided_slice %103 {offsets = [1, 0, 0], sizes = [1, 16, 16], strides = [1, 1, 1]} : vector<3x16x16xf32> to vector<1x16x16xf32>
    %113 = vector.shape_cast %112 : vector<1x16x16xf32> to vector<16x16xf32>
    %114 = vector.broadcast %111 : vector<1x1xf32> to vector<16x16xf32>
    %115 = arith.mulf %114, %113 : vector<16x16xf32>
    %116 = arith.addf %110, %115 : vector<16x16xf32>
    %117 = vector.extract_strided_slice %28 {offsets = [0, 2], sizes = [1, 1], strides = [1, 1]} : vector<1x3xf32> to vector<1x1xf32>
    %118 = vector.extract_strided_slice %103 {offsets = [2, 0, 0], sizes = [1, 16, 16], strides = [1, 1, 1]} : vector<3x16x16xf32> to vector<1x16x16xf32>
    %119 = vector.shape_cast %118 : vector<1x16x16xf32> to vector<16x16xf32>
    %120 = vector.broadcast %117 : vector<1x1xf32> to vector<16x16xf32>
    %121 = arith.mulf %120, %119 : vector<16x16xf32>
    %122 = arith.addf %116, %121 : vector<16x16xf32>
    %cst_52 = arith.constant dense<0.000000e+00> : vector<16x8xf32>
    %123 = tpu.matmul %122, %88, %cst_52 {dimension_numbers = #tpu.dot_dimension_numbers<[1], [0], [0], [1], [0, 0, 1, 1], [], []>} : vector<16x16xf32>, vector<16x8xf32>, vector<16x8xf32> -> vector<16x8xf32>
    %c8 = arith.constant 8 : index
    %c0_53 = arith.constant 0 : index
    %124 = vector.load %arg7[%c8, %c0_53] : memref<32x32xf32, #tpu.memory_space<vmem>>, vector<8x32xf32>
    %cst_54 = arith.constant dense<0.000000e+00> : vector<16x32xf32>
    %125 = tpu.matmul %123, %124, %cst_54 {dimension_numbers = #tpu.dot_dimension_numbers<[1], [0], [0], [1], [0, 0, 1, 1], [], []>} : vector<16x8xf32>, vector<8x32xf32>, vector<16x32xf32> -> vector<16x32xf32>
    %126 = arith.addf %85, %125 : vector<16x32xf32>
    %127 = vector.extract_strided_slice %43 {offsets = [0, 16], sizes = [16, 8], strides = [1, 1]} : vector<16x32xf32> to vector<16x8xf32>
    %128 = vector.extract_strided_slice %38 {offsets = [0, 16], sizes = [16, 8], strides = [1, 1]} : vector<16x32xf32> to vector<16x8xf32>
    %129 = vector.extract_strided_slice %33 {offsets = [0, 16], sizes = [16, 8], strides = [1, 1]} : vector<16x32xf32> to vector<16x8xf32>
    %cst_55 = arith.constant dense<0.000000e+00> : vector<16x16xf32>
    %130 = tpu.matmul %127, %128, %cst_55 {dimension_numbers = #tpu.dot_dimension_numbers<[1], [1], [0], [0], [0, 0, 1, 0], [], []>} : vector<16x8xf32>, vector<16x8xf32>, vector<16x16xf32> -> vector<16x16xf32>
    %cst_56 = arith.constant 0.353553385 : f32
    %131 = vector.broadcast %cst_56 : f32 to vector<16x16xf32>
    %132 = arith.mulf %130, %131 : vector<16x16xf32>
    %133 = vector.shape_cast %132 : vector<16x16xf32> to vector<1x16x16xf32>
    %134 = vector.broadcast %133 : vector<1x16x16xf32> to vector<3x16x16xf32>
    %135 = arith.addf %134, %7 : vector<3x16x16xf32>
    %cst_57 = arith.constant dense<0xFF800000> : vector<3x16xf32>
    %136 = vector.multi_reduction <maximumf>, %135, %cst_57 [2] : vector<3x16x16xf32> to vector<3x16xf32>
    %137 = vector.shape_cast %136 : vector<3x16xf32> to vector<3x16x1xf32>
    %138 = vector.broadcast %137 : vector<3x16x1xf32> to vector<3x16x16xf32>
    %139 = arith.subf %135, %138 : vector<3x16x16xf32>
    %140 = math.exp %139 : vector<3x16x16xf32>
    %cst_58 = arith.constant dense<0.000000e+00> : vector<3x16xf32>
    %141 = vector.multi_reduction <add>, %140, %cst_58 [2] : vector<3x16x16xf32> to vector<3x16xf32>
    %142 = vector.shape_cast %141 : vector<3x16xf32> to vector<3x16x1xf32>
    %143 = vector.broadcast %142 : vector<3x16x1xf32> to vector<3x16x16xf32>
    %144 = arith.divf %140, %143 : vector<3x16x16xf32>
    %cst_59 = arith.constant 0.000000e+00 : f32
    %145 = vector.broadcast %cst_59 : f32 to vector<16x16xf32>
    %146 = vector.extract_strided_slice %28 {offsets = [0, 0], sizes = [1, 1], strides = [1, 1]} : vector<1x3xf32> to vector<1x1xf32>
    %147 = vector.extract_strided_slice %144 {offsets = [0, 0, 0], sizes = [1, 16, 16], strides = [1, 1, 1]} : vector<3x16x16xf32> to vector<1x16x16xf32>
    %148 = vector.shape_cast %147 : vector<1x16x16xf32> to vector<16x16xf32>
    %149 = vector.broadcast %146 : vector<1x1xf32> to vector<16x16xf32>
    %150 = arith.mulf %149, %148 : vector<16x16xf32>
    %151 = arith.addf %145, %150 : vector<16x16xf32>
    %152 = vector.extract_strided_slice %28 {offsets = [0, 1], sizes = [1, 1], strides = [1, 1]} : vector<1x3xf32> to vector<1x1xf32>
    %153 = vector.extract_strided_slice %144 {offsets = [1, 0, 0], sizes = [1, 16, 16], strides = [1, 1, 1]} : vector<3x16x16xf32> to vector<1x16x16xf32>
    %154 = vector.shape_cast %153 : vector<1x16x16xf32> to vector<16x16xf32>
    %155 = vector.broadcast %152 : vector<1x1xf32> to vector<16x16xf32>
    %156 = arith.mulf %155, %154 : vector<16x16xf32>
    %157 = arith.addf %151, %156 : vector<16x16xf32>
    %158 = vector.extract_strided_slice %28 {offsets = [0, 2], sizes = [1, 1], strides = [1, 1]} : vector<1x3xf32> to vector<1x1xf32>
    %159 = vector.extract_strided_slice %144 {offsets = [2, 0, 0], sizes = [1, 16, 16], strides = [1, 1, 1]} : vector<3x16x16xf32> to vector<1x16x16xf32>
    %160 = vector.shape_cast %159 : vector<1x16x16xf32> to vector<16x16xf32>
    %161 = vector.broadcast %158 : vector<1x1xf32> to vector<16x16xf32>
    %162 = arith.mulf %161, %160 : vector<16x16xf32>
    %163 = arith.addf %157, %162 : vector<16x16xf32>
    %cst_60 = arith.constant dense<0.000000e+00> : vector<16x8xf32>
    %164 = tpu.matmul %163, %129, %cst_60 {dimension_numbers = #tpu.dot_dimension_numbers<[1], [0], [0], [1], [0, 0, 1, 1], [], []>} : vector<16x16xf32>, vector<16x8xf32>, vector<16x8xf32> -> vector<16x8xf32>
    %c16 = arith.constant 16 : index
    %c0_61 = arith.constant 0 : index
    %165 = vector.load %arg7[%c16, %c0_61] : memref<32x32xf32, #tpu.memory_space<vmem>>, vector<8x32xf32>
    %cst_62 = arith.constant dense<0.000000e+00> : vector<16x32xf32>
    %166 = tpu.matmul %164, %165, %cst_62 {dimension_numbers = #tpu.dot_dimension_numbers<[1], [0], [0], [1], [0, 0, 1, 1], [], []>} : vector<16x8xf32>, vector<8x32xf32>, vector<16x32xf32> -> vector<16x32xf32>
    %167 = arith.addf %126, %166 : vector<16x32xf32>
    %168 = vector.extract_strided_slice %43 {offsets = [0, 24], sizes = [16, 8], strides = [1, 1]} : vector<16x32xf32> to vector<16x8xf32>
    %169 = vector.extract_strided_slice %38 {offsets = [0, 24], sizes = [16, 8], strides = [1, 1]} : vector<16x32xf32> to vector<16x8xf32>
    %170 = vector.extract_strided_slice %33 {offsets = [0, 24], sizes = [16, 8], strides = [1, 1]} : vector<16x32xf32> to vector<16x8xf32>
    %cst_63 = arith.constant dense<0.000000e+00> : vector<16x16xf32>
    %171 = tpu.matmul %168, %169, %cst_63 {dimension_numbers = #tpu.dot_dimension_numbers<[1], [1], [0], [0], [0, 0, 1, 0], [], []>} : vector<16x8xf32>, vector<16x8xf32>, vector<16x16xf32> -> vector<16x16xf32>
    %cst_64 = arith.constant 0.353553385 : f32
    %172 = vector.broadcast %cst_64 : f32 to vector<16x16xf32>
    %173 = arith.mulf %171, %172 : vector<16x16xf32>
    %174 = vector.shape_cast %173 : vector<16x16xf32> to vector<1x16x16xf32>
    %175 = vector.broadcast %174 : vector<1x16x16xf32> to vector<3x16x16xf32>
    %176 = arith.addf %175, %7 : vector<3x16x16xf32>
    %cst_65 = arith.constant dense<0xFF800000> : vector<3x16xf32>
    %177 = vector.multi_reduction <maximumf>, %176, %cst_65 [2] : vector<3x16x16xf32> to vector<3x16xf32>
    %178 = vector.shape_cast %177 : vector<3x16xf32> to vector<3x16x1xf32>
    %179 = vector.broadcast %178 : vector<3x16x1xf32> to vector<3x16x16xf32>
    %180 = arith.subf %176, %179 : vector<3x16x16xf32>
    %181 = math.exp %180 : vector<3x16x16xf32>
    %cst_66 = arith.constant dense<0.000000e+00> : vector<3x16xf32>
    %182 = vector.multi_reduction <add>, %181, %cst_66 [2] : vector<3x16x16xf32> to vector<3x16xf32>
    %183 = vector.shape_cast %182 : vector<3x16xf32> to vector<3x16x1xf32>
    %184 = vector.broadcast %183 : vector<3x16x1xf32> to vector<3x16x16xf32>
    %185 = arith.divf %181, %184 : vector<3x16x16xf32>
    %cst_67 = arith.constant 0.000000e+00 : f32
    %186 = vector.broadcast %cst_67 : f32 to vector<16x16xf32>
    %187 = vector.extract_strided_slice %28 {offsets = [0, 0], sizes = [1, 1], strides = [1, 1]} : vector<1x3xf32> to vector<1x1xf32>
    %188 = vector.extract_strided_slice %185 {offsets = [0, 0, 0], sizes = [1, 16, 16], strides = [1, 1, 1]} : vector<3x16x16xf32> to vector<1x16x16xf32>
    %189 = vector.shape_cast %188 : vector<1x16x16xf32> to vector<16x16xf32>
    %190 = vector.broadcast %187 : vector<1x1xf32> to vector<16x16xf32>
    %191 = arith.mulf %190, %189 : vector<16x16xf32>
    %192 = arith.addf %186, %191 : vector<16x16xf32>
    %193 = vector.extract_strided_slice %28 {offsets = [0, 1], sizes = [1, 1], strides = [1, 1]} : vector<1x3xf32> to vector<1x1xf32>
    %194 = vector.extract_strided_slice %185 {offsets = [1, 0, 0], sizes = [1, 16, 16], strides = [1, 1, 1]} : vector<3x16x16xf32> to vector<1x16x16xf32>
    %195 = vector.shape_cast %194 : vector<1x16x16xf32> to vector<16x16xf32>
    %196 = vector.broadcast %193 : vector<1x1xf32> to vector<16x16xf32>
    %197 = arith.mulf %196, %195 : vector<16x16xf32>
    %198 = arith.addf %192, %197 : vector<16x16xf32>
    %199 = vector.extract_strided_slice %28 {offsets = [0, 2], sizes = [1, 1], strides = [1, 1]} : vector<1x3xf32> to vector<1x1xf32>
    %200 = vector.extract_strided_slice %185 {offsets = [2, 0, 0], sizes = [1, 16, 16], strides = [1, 1, 1]} : vector<3x16x16xf32> to vector<1x16x16xf32>
    %201 = vector.shape_cast %200 : vector<1x16x16xf32> to vector<16x16xf32>
    %202 = vector.broadcast %199 : vector<1x1xf32> to vector<16x16xf32>
    %203 = arith.mulf %202, %201 : vector<16x16xf32>
    %204 = arith.addf %198, %203 : vector<16x16xf32>
    %cst_68 = arith.constant dense<0.000000e+00> : vector<16x8xf32>
    %205 = tpu.matmul %204, %170, %cst_68 {dimension_numbers = #tpu.dot_dimension_numbers<[1], [0], [0], [1], [0, 0, 1, 1], [], []>} : vector<16x16xf32>, vector<16x8xf32>, vector<16x8xf32> -> vector<16x8xf32>
    %c24 = arith.constant 24 : index
    %c0_69 = arith.constant 0 : index
    %206 = vector.load %arg7[%c24, %c0_69] : memref<32x32xf32, #tpu.memory_space<vmem>>, vector<8x32xf32>
    %cst_70 = arith.constant dense<0.000000e+00> : vector<16x32xf32>
    %207 = tpu.matmul %205, %206, %cst_70 {dimension_numbers = #tpu.dot_dimension_numbers<[1], [0], [0], [1], [0, 0, 1, 1], [], []>} : vector<16x8xf32>, vector<8x32xf32>, vector<16x32xf32> -> vector<16x32xf32>
    %208 = arith.addf %167, %207 : vector<16x32xf32>
    %c0_71 = arith.constant 0 : index
    %c0_72 = arith.constant 0 : index
    %209 = vector.load %arg8[%c0_71, %c0_72] : memref<1x32xf32, #tpu.memory_space<vmem>>, vector<1x32xf32>
    %210 = vector.broadcast %209 : vector<1x32xf32> to vector<16x32xf32>
    %211 = arith.addf %208, %210 : vector<16x32xf32>
    %c0_73 = arith.constant 0 : index
    %c0_74 = arith.constant 0 : index
    %c0_75 = arith.constant 0 : index
    %212 = vector.load %arg12[%c0_73, %c0_74, %c0_75] : memref<1x16x32xf32, #tpu.memory_space<vmem>>, vector<1x16x32xf32>
    %213 = vector.shape_cast %212 : vector<1x16x32xf32> to vector<16x32xf32>
    %214 = vector.shape_cast %211 : vector<16x32xf32> to vector<1x16x32xf32>
    tpu.vector_store %arg12[%c0_73, %c0_74, %c0_75], %214 {strides = array<i32>} : memref<1x16x32xf32, #tpu.memory_space<vmem>>, vector<1x16x32xf32>,
    return
  }
  func.func @transform_0(%arg0: i32) -> (i32, i32, i32) {
    %c0_i32 = arith.constant 0 : i32
    %c0_i32_0 = arith.constant 0 : i32
    %c0_i32_1 = arith.constant 0 : i32
    return %arg0, %c0_i32, %c0_i32_0 : i32, i32, i32
  }
  func.func @transform_1(%arg0: i32) -> (i32, i32, i32) {
    %c0_i32 = arith.constant 0 : i32
    %c0_i32_0 = arith.constant 0 : i32
    %c0_i32_1 = arith.constant 0 : i32
    return %arg0, %c0_i32, %c0_i32_0 : i32, i32, i32
  }
  func.func @transform_2(%arg0: i32) -> (i32, i32, i32) {
    %c0_i32 = arith.constant 0 : i32
    %c0_i32_0 = arith.constant 0 : i32
    %c0_i32_1 = arith.constant 0 : i32
    return %arg0, %c0_i32, %c0_i32_0 : i32, i32, i32
  }
  func.func @transform_3(%arg0: i32) -> (i32, i32, i32, i32) {
    %c0_i32 = arith.constant 0 : i32
    %c0_i32_0 = arith.constant 0 : i32
    %c0_i32_1 = arith.constant 0 : i32
    %c0_i32_2 = arith.constant 0 : i32
    return %arg0, %c0_i32, %c0_i32_0, %c0_i32_1 : i32, i32, i32, i32
  }
  func.func @transform_4(%arg0: i32) -> (i32, i32) {
    %c0_i32 = arith.constant 0 : i32
    %c0_i32_0 = arith.constant 0 : i32
    %c0_i32_1 = arith.constant 0 : i32
    return %c0_i32, %c0_i32_0 : i32, i32
  }
  func.func @transform_5(%arg0: i32) -> (i32, i32) {
    %c0_i32 = arith.constant 0 : i32
    %c0_i32_0 = arith.constant 0 : i32
    %c0_i32_1 = arith.constant 0 : i32
    return %c0_i32, %c0_i32_0 : i32, i32
  }
  func.func @transform_6(%arg0: i32) -> (i32, i32) {
    %c0_i32 = arith.constant 0 : i32
    %c0_i32_0 = arith.constant 0 : i32
    %c0_i32_1 = arith.constant 0 : i32
    return %c0_i32, %c0_i32_0 : i32, i32
  }
  func.func @transform_7(%arg0: i32) -> (i32, i32) {
    %c0_i32 = arith.constant 0 : i32
    %c0_i32_0 = arith.constant 0 : i32
    %c0_i32_1 = arith.constant 0 : i32
    return %c0_i32, %c0_i32_0 : i32, i32
  }
  func.func @transform_8(%arg0: i32) -> (i32, i32) {
    %c0_i32 = arith.constant 0 : i32
    %c0_i32_0 = arith.constant 0 : i32
    %c0_i32_1 = arith.constant 0 : i32
    return %c0_i32, %c0_i32_0 : i32, i32
  }
  func.func @transform_9(%arg0: i32) -> (i32, i32) {
    %c0_i32 = arith.constant 0 : i32
    %c0_i32_0 = arith.constant 0 : i32
    %c0_i32_1 = arith.constant 0 : i32
    return %c0_i32, %c0_i32_0 : i32, i32
  }
  func.func @transform_10(%arg0: i32) -> (i32, i32) {
    %c0_i32 = arith.constant 0 : i32
    %c0_i32_0 = arith.constant 0 : i32
    %c0_i32_1 = arith.constant 0 : i32
    return %c0_i32, %c0_i32_0 : i32, i32
  }
  func.func @transform_11(%arg0: i32) -> (i32, i32, i32) {
    %c0_i32 = arith.constant 0 : i32
    %c0_i32_0 = arith.constant 0 : i32
    %c0_i32_1 = arith.constant 0 : i32
    return %arg0, %c0_i32, %c0_i32_0 : i32, i32, i32
  }
}

</mosaic_0001>

<llo_original>
// kernel: sa_routing_block.1
$region0: #{sa_routing_block.1}
  #allocation0 [shape = 'u32[]', space=smem, size = 0x4, offset = 0x4, fixed_abs, tag = 'smem constant byte address 0x4 - core index']
  #allocation1 [shape = 'u32[144,128]{1,0:T(1,128)}', space=vmem, size = 0x12000, scoped, tag = 'internal scratch']
  %s0 = inlined_call_operand.vmem [shape: f32[2,16,32], index: 0, kind: input, shape index: {}]
  %s1 = inlined_call_operand.vmem [shape: f32[2,16,32], index: 1, kind: input, shape index: {}]
  %s2 = inlined_call_operand.hbm [shape: f32[2,16,32], index: 2, kind: input, shape index: {}]
  %s3 = inlined_call_operand.hbm [shape: f32[2,3,16,16], index: 3, kind: input, shape index: {}]
  %s4 = inlined_call_operand.hbm [shape: f32[32,96], index: 4, kind: input, shape index: {}]
  %s5 = inlined_call_operand.vmem [shape: f32[1,96], index: 5, kind: input, shape index: {}]
  %s6 = inlined_call_operand.hbm [shape: f32[32,32], index: 6, kind: input, shape index: {}]
  %s7 = inlined_call_operand.vmem [shape: f32[1,32], index: 7, kind: input, shape index: {}]
  %s8 = inlined_call_operand.vmem [shape: f32[32,16], index: 8, kind: input, shape index: {}]
  %s9 = inlined_call_operand.vmem [shape: f32[16,3], index: 9, kind: input, shape index: {}]
  %s10 = inlined_call_operand.vmem [shape: f32[1,3], index: 10, kind: input, shape index: {}]
  %s11 = inlined_call_operand.hbm [shape: f32[2,16,32], index: 11, kind: output, shape index: {}]
  %s12 = sld [smem:[#allocation0]]
  $region93: #{sa_routing_block.1} parent=0
    _
  %s14 = ssub.s32 1, %s12
  %s15 = scalar_select 0, %s14, %s12
  $region1: #{sa_routing_block.1} parent=0
    #allocation2 [shape = 'u8[16384]{0}', space=vmem, size = 0x4000, scoped, tag = 'input window, operand 2']
    #allocation3 [shape = 's32[2]{0}', space=sflag, size = 0x8, scoped, tag = 'scoped memory for sa_routing_block.1']
    #allocation4 [shape = 's32[2]{0}', space=sflag, size = 0x8, scoped, tag = 'scoped memory for sa_routing_block.1']
    #allocation5 [shape = 'u8[49152]{0}', space=vmem, size = 0xc000, scoped, tag = 'input window, operand 3']
    #allocation6 [shape = 's32[2]{0}', space=sflag, size = 0x8, scoped, tag = 'scoped memory for sa_routing_block.1']
    #allocation7 [shape = 'u8[16384]{0}', space=vmem, size = 0x4000, scoped, tag = 'input window, operand 4, single buffered']
    #allocation8 [shape = 'u8[16384]{0}', space=vmem, size = 0x4000, scoped, tag = 'input window, operand 6, single buffered']
    #allocation9 [shape = 's32[1]{0}', space=sflag, size = 0x4, scoped, tag = 'scoped memory for sa_routing_block.1']
    #allocation10 [shape = 'u8[16384]{0}', space=vmem, size = 0x4000, scoped, tag = 'output window, operand 0']
    %16 = vsyncpa [#allocation3], 0
    %s17 = scalar_lea.sflag [#allocation3], 1
    %18 = vsyncpa %s17, 0
    %19 = vsyncpa [#allocation6], 0
    %s20 = scalar_lea.sflag [#allocation6], 1
    %21 = vsyncpa %s20, 0
    %22 = vsyncpa [#allocation9], 0
    %23 = vsyncpa [#allocation4], 0
    %s24 = scalar_lea.sflag [#allocation4], 1
    %25 = vsyncpa %s24, 0
    loop: start=0, step=1, limit=4
    $region2: #{sa_routing_block.1} parent=1 // loop_pre_header
      _
    $region3: #{sa_routing_block.1} parent=1 // loop_header
      %s27 = sphi 0, %s31
      %p28 = scmp.ge.s32.totalorder %s27, 4
      %s37 = sphi 0, %s39
      %s40 = sphi 0, %s37
      %s41 = sphi 0, %s40
      %s57 = sphi 0, %s41
      %s63 = sphi 0, %s65
      %s66 = sphi 0, %s63
      %s67 = sphi 0, %s66
      %s83 = sphi 0, %s67
      %s89 = sphi 0, %s91
      %s92 = sphi 0, %s89
      %s93 = sphi 0, %s92
      %s109 = sphi 0, %s93
      %s115 = sphi 0, %s117
      %s118 = sphi 0, %s115
      %s119 = sphi 0, %s118
      %s135 = sphi 0, %s119
      %s139 = sphi 0, %s139
      %s141 = sphi 0, %s139
      %s142 = sphi 0, %s141
      %s156 = sphi 0, %s142
      %s160 = sphi 0, %s160
      %s162 = sphi 0, %s160
      %s163 = sphi 0, %s162
      %s177 = sphi 0, %s163
      %s181 = sphi 0, %s181
      %s183 = sphi 0, %s181
      %s184 = sphi 0, %s183
      %s198 = sphi 0, %s184
      %s202 = sphi 0, %s202
      %s204 = sphi 0, %s202
      %s205 = sphi 0, %s204
      %s219 = sphi 0, %s205
      %s223 = sphi 0, %s223
      %s225 = sphi 0, %s223
      %s226 = sphi 0, %s225
      %s240 = sphi 0, %s226
      %s244 = sphi 0, %s244
      %s246 = sphi 0, %s244
      %s247 = sphi 0, %s246
      %s261 = sphi 0, %s247
      %s265 = sphi 0, %s265
      %s267 = sphi 0, %s265
      %s268 = sphi 0, %s267
      %s282 = sphi 0, %s268
      %s288 = sphi 0, %s290
      %s291 = sphi 0, %s288
      %s292 = sphi 0, %s291
      %s308 = sphi 0, %s292
    $region4: #{sa_routing_block.1} parent=1 // loop_header_branch
      %30 = sbr.rel (%p28) target = $region8
    $region5: #{sa_routing_block.1} parent=1 // loop_body
      %s32 = ssub.s32 %s27, 1
      %s33 = ssub.s32 %s27, 2
      %s34 = sadd.s32 %s27, 1
      %s35 = ssub.s32 %s27, %s34
      %p36 = scmp.eq.s32.totalorder %s35, 0
      %s38 = sadd.s32 %s37, 1
      %s39 = scalar_select %p36, %s37, %s38
      %p42 = pneg %p36
      %p43 = scmp.eq.s32.totalorder %s27, 1
      %p44 = por %p42, %p43
      %p45 = scmp.ne.s32.totalorder %s37, %s40
      %p46 = scmp.eq.s32.totalorder %s27, 0
      %p47 = por %p45, %p46
      %p48 = scmp.ne.s32.totalorder %s37, %s40
      %p49 = scmp.eq.s32.totalorder %s32, 1
      %p50 = por %p48, %p49
      %p51 = scmp.ne.s32.totalorder %s40, %s41
      %p52 = scmp.eq.s32.totalorder %s32, 0
      %p53 = por %p51, %p52
      %p54 = scmp.ne.s32.totalorder %s40, %s41
      %p55 = scmp.eq.s32.totalorder %s33, 1
      %p56 = por %p54, %p55
      %p58 = scmp.ne.s32.totalorder %s41, %s57
      %p59 = scmp.eq.s32.totalorder %s33, 0
      %p60 = por %p58, %p59
      %s61 = ssub.s32 %s27, %s34
      %p62 = scmp.eq.s32.totalorder %s61, 0
      %s64 = sadd.s32 %s63, 1
      %s65 = scalar_select %p62, %s63, %s64
      %p68 = pneg %p62
      %p69 = scmp.eq.s32.totalorder %s27, 1
      %p70 = por %p68, %p69
      %p71 = scmp.ne.s32.totalorder %s63, %s66
      %p72 = scmp.eq.s32.totalorder %s27, 0
      %p73 = por %p71, %p72
      %p74 = scmp.ne.s32.totalorder %s63, %s66
      %p75 = scmp.eq.s32.totalorder %s32, 1
      %p76 = por %p74, %p75
      %p77 = scmp.ne.s32.totalorder %s66, %s67
      %p78 = scmp.eq.s32.totalorder %s32, 0
      %p79 = por %p77, %p78
      %p80 = scmp.ne.s32.totalorder %s66, %s67
      %p81 = scmp.eq.s32.totalorder %s33, 1
      %p82 = por %p80, %p81
      %p84 = scmp.ne.s32.totalorder %s67, %s83
      %p85 = scmp.eq.s32.totalorder %s33, 0
      %p86 = por %p84, %p85
      %s87 = ssub.s32 %s27, %s34
      %p88 = scmp.eq.s32.totalorder %s87, 0
      %s90 = sadd.s32 %s89, 1
      %s91 = scalar_select %p88, %s89, %s90
      %p94 = pneg %p88
      %p95 = scmp.eq.s32.totalorder %s27, 1
      %p96 = por %p94, %p95
      %p97 = scmp.ne.s32.totalorder %s89, %s92
      %p98 = scmp.eq.s32.totalorder %s27, 0
      %p99 = por %p97, %p98
      %p100 = scmp.ne.s32.totalorder %s89, %s92
      %p101 = scmp.eq.s32.totalorder %s32, 1
      %p102 = por %p100, %p101
      %p103 = scmp.ne.s32.totalorder %s92, %s93
      %p104 = scmp.eq.s32.totalorder %s32, 0
      %p105 = por %p103, %p104
      %p106 = scmp.ne.s32.totalorder %s92, %s93
      %p107 = scmp.eq.s32.totalorder %s33, 1
      %p108 = por %p106, %p107
      %p110 = scmp.ne.s32.totalorder %s93, %s109
      %p111 = scmp.eq.s32.totalorder %s33, 0
      %p112 = por %p110, %p111
      %s113 = ssub.s32 %s27, %s34
      %p114 = scmp.eq.s32.totalorder %s113, 0
      %s116 = sadd.s32 %s115, 1
      %s117 = scalar_select %p114, %s115, %s116
      %p120 = pneg %p114
      %p121 = scmp.eq.s32.totalorder %s27, 1
      %p122 = por %p120, %p121
      %p123 = scmp.ne.s32.totalorder %s115, %s118
      %p124 = scmp.eq.s32.totalorder %s27, 0
      %p125 = por %p123, %p124
      %p126 = scmp.ne.s32.totalorder %s115, %s118
      %p127 = scmp.eq.s32.totalorder %s32, 1
      %p128 = por %p126, %p127
      %p129 = scmp.ne.s32.totalorder %s118, %s119
      %p130 = scmp.eq.s32.totalorder %s32, 0
      %p131 = por %p129, %p130
      %p132 = scmp.ne.s32.totalorder %s118, %s119
      %p133 = scmp.eq.s32.totalorder %s33, 1
      %p134 = por %p132, %p133
      %p136 = scmp.ne.s32.totalorder %s119, %s135
      %p137 = scmp.eq.s32.totalorder %s33, 0
      %p138 = por %p136, %p137
      %s140 = sadd.s32 %s139, 1
      %p143 = scmp.eq.s32.totalorder %s27, 1
      %p144 = scmp.ne.s32.totalorder %s139, %s141
      %p145 = scmp.eq.s32.totalorder %s27, 0
      %p146 = por %p144, %p145
      %p147 = scmp.ne.s32.totalorder %s139, %s141
      %p148 = scmp.eq.s32.totalorder %s32, 1
      %p149 = por %p147, %p148
      %p150 = scmp.ne.s32.totalorder %s141, %s142
      %p151 = scmp.eq.s32.totalorder %s32, 0
      %p152 = por %p150, %p151
      %p153 = scmp.ne.s32.totalorder %s141, %s142
      %p154 = scmp.eq.s32.totalorder %s33, 1
      %p155 = por %p153, %p154
      %p157 = scmp.ne.s32.totalorder %s142, %s156
      %p158 = scmp.eq.s32.totalorder %s33, 0
      %p159 = por %p157, %p158
      %s161 = sadd.s32 %s160, 1
      %p164 = scmp.eq.s32.totalorder %s27, 1
      %p165 = scmp.ne.s32.totalorder %s160, %s162
      %p166 = scmp.eq.s32.totalorder %s27, 0
      %p167 = por %p165, %p166
      %p168 = scmp.ne.s32.totalorder %s160, %s162
      %p169 = scmp.eq.s32.totalorder %s32, 1
      %p170 = por %p168, %p169
      %p171 = scmp.ne.s32.totalorder %s162, %s163
      %p172 = scmp.eq.s32.totalorder %s32, 0
      %p173 = por %p171, %p172
      %p174 = scmp.ne.s32.totalorder %s162, %s163
      %p175 = scmp.eq.s32.totalorder %s33, 1
      %p176 = por %p174, %p175
      %p178 = scmp.ne.s32.totalorder %s163, %s177
      %p179 = scmp.eq.s32.totalorder %s33, 0
      %p180 = por %p178, %p179
      %s182 = sadd.s32 %s181, 1
      %p185 = scmp.eq.s32.totalorder %s27, 1
      %p186 = scmp.ne.s32.totalorder %s181, %s183
      %p187 = scmp.eq.s32.totalorder %s27, 0
      %p188 = por %p186, %p187
      %p189 = scmp.ne.s32.totalorder %s181, %s183
      %p190 = scmp.eq.s32.totalorder %s32, 1
      %p191 = por %p189, %p190
      %p192 = scmp.ne.s32.totalorder %s183, %s184
      %p193 = scmp.eq.s32.totalorder %s32, 0
      %p194 = por %p192, %p193
      %p195 = scmp.ne.s32.totalorder %s183, %s184
      %p196 = scmp.eq.s32.totalorder %s33, 1
      %p197 = por %p195, %p196
      %p199 = scmp.ne.s32.totalorder %s184, %s198
      %p200 = scmp.eq.s32.totalorder %s33, 0
      %p201 = por %p199, %p200
      %s203 = sadd.s32 %s202, 1
      %p206 = scmp.eq.s32.totalorder %s27, 1
      %p207 = scmp.ne.s32.totalorder %s202, %s204
      %p208 = scmp.eq.s32.totalorder %s27, 0
      %p209 = por %p207, %p208
      %p210 = scmp.ne.s32.totalorder %s202, %s204
      %p211 = scmp.eq.s32.totalorder %s32, 1
      %p212 = por %p210, %p211
      %p213 = scmp.ne.s32.totalorder %s204, %s205
      %p214 = scmp.eq.s32.totalorder %s32, 0
      %p215 = por %p213, %p214
      %p216 = scmp.ne.s32.totalorder %s204, %s205
      %p217 = scmp.eq.s32.totalorder %s33, 1
      %p218 = por %p216, %p217
      %p220 = scmp.ne.s32.totalorder %s205, %s219
      %p221 = scmp.eq.s32.totalorder %s33, 0
      %p222 = por %p220, %p221
      %s224 = sadd.s32 %s223, 1
      %p227 = scmp.eq.s32.totalorder %s27, 1
      %p228 = scmp.ne.s32.totalorder %s223, %s225
      %p229 = scmp.eq.s32.totalorder %s27, 0
      %p230 = por %p228, %p229
      %p231 = scmp.ne.s32.totalorder %s223, %s225
      %p232 = scmp.eq.s32.totalorder %s32, 1
      %p233 = por %p231, %p232
      %p234 = scmp.ne.s32.totalorder %s225, %s226
      %p235 = scmp.eq.s32.totalorder %s32, 0
      %p236 = por %p234, %p235
      %p237 = scmp.ne.s32.totalorder %s225, %s226
      %p238 = scmp.eq.s32.totalorder %s33, 1
      %p239 = por %p237, %p238
      %p241 = scmp.ne.s32.totalorder %s226, %s240
      %p242 = scmp.eq.s32.totalorder %s33, 0
      %p243 = por %p241, %p242
      %s245 = sadd.s32 %s244, 1
      %p248 = scmp.eq.s32.totalorder %s27, 1
      %p249 = scmp.ne.s32.totalorder %s244, %s246
      %p250 = scmp.eq.s32.totalorder %s27, 0
      %p251 = por %p249, %p250
      %p252 = scmp.ne.s32.totalorder %s244, %s246
      %p253 = scmp.eq.s32.totalorder %s32, 1
      %p254 = por %p252, %p253
      %p255 = scmp.ne.s32.totalorder %s246, %s247
      %p256 = scmp.eq.s32.totalorder %s32, 0
      %p257 = por %p255, %p256
      %p258 = scmp.ne.s32.totalorder %s246, %s247
      %p259 = scmp.eq.s32.totalorder %s33, 1
      %p260 = por %p258, %p259
      %p262 = scmp.ne.s32.totalorder %s247, %s261
      %p263 = scmp.eq.s32.totalorder %s33, 0
      %p264 = por %p262, %p263
      %s266 = sadd.s32 %s265, 1
      %p269 = scmp.eq.s32.totalorder %s27, 1
      %p270 = scmp.ne.s32.totalorder %s265, %s267
      %p271 = scmp.eq.s32.totalorder %s27, 0
      %p272 = por %p270, %p271
      %p273 = scmp.ne.s32.totalorder %s265, %s267
      %p274 = scmp.eq.s32.totalorder %s32, 1
      %p275 = por %p273, %p274
      %p276 = scmp.ne.s32.totalorder %s267, %s268
      %p277 = scmp.eq.s32.totalorder %s32, 0
      %p278 = por %p276, %p277
      %p279 = scmp.ne.s32.totalorder %s267, %s268
      %p280 = scmp.eq.s32.totalorder %s33, 1
      %p281 = por %p279, %p280
      %p283 = scmp.ne.s32.totalorder %s268, %s282
      %p284 = scmp.eq.s32.totalorder %s33, 0
      %p285 = por %p283, %p284
      %s286 = ssub.s32 %s27, %s34
      %p287 = scmp.eq.s32.totalorder %s286, 0
      %s289 = sadd.s32 %s288, 1
      %s290 = scalar_select %p287, %s288, %s289
      %p293 = pneg %p287
      %p294 = scmp.eq.s32.totalorder %s27, 1
      %p295 = por %p293, %p294
      %p296 = scmp.ne.s32.totalorder %s288, %s291
      %p297 = scmp.eq.s32.totalorder %s27, 0
      %p298 = por %p296, %p297
      %p299 = scmp.ne.s32.totalorder %s288, %s291
      %p300 = scmp.eq.s32.totalorder %s32, 1
      %p301 = por %p299, %p300
      %p302 = scmp.ne.s32.totalorder %s291, %s292
      %p303 = scmp.eq.s32.totalorder %s32, 0
      %p304 = por %p302, %p303
      %p305 = scmp.ne.s32.totalorder %s291, %s292
      %p306 = scmp.eq.s32.totalorder %s33, 1
      %p307 = por %p305, %p306
      %p309 = scmp.ne.s32.totalorder %s292, %s308
      %p310 = scmp.eq.s32.totalorder %s33, 0
      %p311 = por %p309, %p310
      %p312 = scmp.le.s32.totalorder 1, %s27
      %p313 = scmp.lt.s32.totalorder %s27, 3
      %p314 = pnand %p312, %p313
      %p315 = pneg %p314
      // Predicated region
      $region9: #{sa_routing_block.1} parent=5 // pred_check
        _
      $region10: #{sa_routing_block.1} parent=5 // pred_check_branch
        %317 = sbr.rel (%p314) target = $region12
      $region11: #{sa_routing_block.1} parent=5 // pred_region
        %s318 = ssub.s32 %s27, 1
        // Predicated region
        $region13: #{sa_routing_block.1} parent=11 // pred_check
          %p319 = pneg %p152
        $region14: #{sa_routing_block.1} parent=11 // pred_check_branch
          %321 = sbr.rel (%p319) target = $region16
        $region15: #{sa_routing_block.1} parent=11 // pred_region
          %s323 = ssub.s32 512, 512
          %324 = vsyncadd [#allocation6], %s323
          %s325 = sshll.u32 [#allocation7], 4
          %s326 = int_to_ptr.vmem [resolvable:$true] %s325
          %331 = dma.hbm_to_vmem [thread:$0]  %s4, 512, %s326, [#allocation6], 128, 128, 8
        $region16: #{sa_routing_block.1} parent=11 // pred_fallthru
          _
        // Predicated region
        $region17: #{sa_routing_block.1} parent=11 // pred_check
          %p332 = pneg %p173
        $region18: #{sa_routing_block.1} parent=11 // pred_check_branch
          %334 = sbr.rel (%p332) target = $region20
        $region19: #{sa_routing_block.1} parent=11 // pred_region
          _
        $region20: #{sa_routing_block.1} parent=11 // pred_fallthru
          _
        // Predicated region
        $region21: #{sa_routing_block.1} parent=11 // pred_check
          %p335 = pneg %p194
        $region22: #{sa_routing_block.1} parent=11 // pred_check_branch
          %337 = sbr.rel (%p335) target = $region24
        $region23: #{sa_routing_block.1} parent=11 // pred_region
          %s339 = ssub.s32 512, 512
          %340 = vsyncadd [#allocation9], %s339
          %s341 = sshll.u32 [#allocation8], 4
          %s342 = int_to_ptr.vmem [resolvable:$true] %s341
          %347 = dma.hbm_to_vmem [thread:$0]  %s6, 512, %s342, [#allocation9], 128, 128, 8
        $region24: #{sa_routing_block.1} parent=11 // pred_fallthru
          _
        // Predicated region
        $region25: #{sa_routing_block.1} parent=11 // pred_check
          %p348 = pneg %p215
        $region26: #{sa_routing_block.1} parent=11 // pred_check_branch
          %350 = sbr.rel (%p348) target = $region28
        $region27: #{sa_routing_block.1} parent=11 // pred_region
          _
        $region28: #{sa_routing_block.1} parent=11 // pred_fallthru
          _
        // Predicated region
        $region29: #{sa_routing_block.1} parent=11 // pred_check
          %p351 = pneg %p236
        $region30: #{sa_routing_block.1} parent=11 // pred_check_branch
          %353 = sbr.rel (%p351) target = $region32
        $region31: #{sa_routing_block.1} parent=11 // pred_region
          _
        $region32: #{sa_routing_block.1} parent=11 // pred_fallthru
          _
        // Predicated region
        $region33: #{sa_routing_block.1} parent=11 // pred_check
          %p354 = pneg %p257
        $region34: #{sa_routing_block.1} parent=11 // pred_check_branch
          %356 = sbr.rel (%p354) target = $region36
        $region35: #{sa_routing_block.1} parent=11 // pred_region
          _
        $region36: #{sa_routing_block.1} parent=11 // pred_fallthru
          _
        // Predicated region
        $region37: #{sa_routing_block.1} parent=11 // pred_check
          %p357 = pneg %p278
        $region38: #{sa_routing_block.1} parent=11 // pred_check_branch
          %359 = sbr.rel (%p357) target = $region40
        $region39: #{sa_routing_block.1} parent=11 // pred_region
          _
        $region40: #{sa_routing_block.1} parent=11 // pred_fallthru
          _
      $region12: #{sa_routing_block.1} parent=5 // pred_fallthru
        _
      %p360 = scmp.lt.s32.totalorder %s27, 2
      // Predicated region
      $region41: #{sa_routing_block.1} parent=5 // pred_check
        %p361 = pneg %p360
      $region42: #{sa_routing_block.1} parent=5 // pred_check_branch
        %363 = sbr.rel (%p361) target = $region44
      $region43: #{sa_routing_block.1} parent=5 // pred_region
        // Predicated region
        $region45: #{sa_routing_block.1} parent=43 // pred_check
          %p364 = pneg %p47
        $region46: #{sa_routing_block.1} parent=43 // pred_check_branch
          %366 = sbr.rel (%p364) target = $region48
        $region47: #{sa_routing_block.1} parent=43 // pred_region
          %p367 = scmp.lt.s32.totalorder %s27, 1
          %s368 = scalar_select %p367, %s27, 1
          %s369 = smul.addr %s368, 2
          %s370 = smul.addr %s369, 8
          %s371 = scalar_lea.vmem %s0, %s370
        $region48: #{sa_routing_block.1} parent=43 // pred_fallthru
          _
        // Predicated region
        $region49: #{sa_routing_block.1} parent=43 // pred_check
          %p372 = pneg %p73
        $region50: #{sa_routing_block.1} parent=43 // pred_check_branch
          %374 = sbr.rel (%p372) target = $region52
        $region51: #{sa_routing_block.1} parent=43 // pred_region
          %p375 = scmp.lt.s32.totalorder %s27, 1
          %s376 = scalar_select %p375, %s27, 1
          %s377 = smul.addr %s376, 2
          %s378 = smul.addr %s377, 8
          %s379 = scalar_lea.vmem %s1, %s378
        $region52: #{sa_routing_block.1} parent=43 // pred_fallthru
          _
        // Predicated region
        $region53: #{sa_routing_block.1} parent=43 // pred_check
          %p380 = pneg %p99
        $region54: #{sa_routing_block.1} parent=43 // pred_check_branch
          %382 = sbr.rel (%p380) target = $region56
        $region55: #{sa_routing_block.1} parent=43 // pred_region
          %s383 = sand.u32 %s89, 1
          %s384 = scalar_lea.sflag [#allocation3], %s383
          %s385 = sand.u32 %s89, 1
          %s386 = smul.addr %s385, 16
          %s387 = scalar_lea.vmem [#allocation2], %s386
          %s389 = ssub.s32 256, 256
          %390 = vsyncadd %s384, %s389
          %s391 = smul.addr %s27, 2
          %s392 = smul.addr %s391, 128
          %s393 = scalar_lea.hbm %s2, %s392
          %s394 = sshll.u32 %s387, 4
          %s395 = int_to_ptr.vmem [resolvable:$true] %s394
          %400 = dma.hbm_to_vmem [thread:$0]  %s393, 256, %s395, %s384, 128, 128, 8
        $region56: #{sa_routing_block.1} parent=43 // pred_fallthru
          _
        // Predicated region
        $region57: #{sa_routing_block.1} parent=43 // pred_check
          %p401 = pneg %p125
        $region58: #{sa_routing_block.1} parent=43 // pred_check_branch
          %403 = sbr.rel (%p401) target = $region60
        $region59: #{sa_routing_block.1} parent=43 // pred_region
          %s404 = sand.u32 %s27, 1
          %s405 = scalar_lea.sflag [#allocation6], %s404
          %s406 = sand.u32 %s115, 1
          %s407 = smul.addr %s406, 48
          %s408 = scalar_lea.vmem [#allocation5], %s407
          %s410 = ssub.s32 768, 768
          %411 = vsyncadd %s405, %s410
          %s412 = smul.addr %s27, 6
          %s413 = smul.addr %s412, 128
          %s414 = scalar_lea.hbm %s3, %s413
          %s415 = sshll.u32 %s408, 4
          %s416 = int_to_ptr.vmem [resolvable:$true] %s415
          %421 = dma.hbm_to_vmem [thread:$0]  %s414, 768, %s416, %s405, 128, 128, 8
        $region60: #{sa_routing_block.1} parent=43 // pred_fallthru
          _
      $region44: #{sa_routing_block.1} parent=5 // pred_fallthru
        _
      %p422 = scmp.le.s32.totalorder 1, %s27
      %p423 = scmp.lt.s32.totalorder %s27, 3
      %p424 = pnand %p422, %p423
      %p425 = pneg %p424
      // Predicated region
      $region61: #{sa_routing_block.1} parent=5 // pred_check
        _
      $region62: #{sa_routing_block.1} parent=5 // pred_check_branch
        %427 = sbr.rel (%p424) target = $region64
      $region63: #{sa_routing_block.1} parent=5 // pred_region
        %s428 = ssub.s32 %s27, 1
        %s429 = sand.u32 %s92, 1
        %s430 = scalar_lea.sflag [#allocation3], %s429
        %s431 = sand.u32 %s92, 1
        %s432 = smul.addr %s431, 16
        %s433 = scalar_lea.vmem [#allocation2], %s432
        // Predicated region
        $region65: #{sa_routing_block.1} parent=63 // pred_check
          %p434 = pneg %p105
        $region66: #{sa_routing_block.1} parent=63 // pred_check_branch
          %436 = sbr.rel (%p434) target = $region68
        $region67: #{sa_routing_block.1} parent=63 // pred_region
          %437 = dma.done %s430, 256
        $region68: #{sa_routing_block.1} parent=63 // pred_fallthru
          _
        %s438 = sand.u32 %s32, 1
        %s439 = scalar_lea.sflag [#allocation6], %s438
        %s440 = sand.u32 %s118, 1
        %s441 = smul.addr %s440, 48
        %s442 = scalar_lea.vmem [#allocation5], %s441
        // Predicated region
        $region69: #{sa_routing_block.1} parent=63 // pred_check
          %p443 = pneg %p131
        $region70: #{sa_routing_block.1} parent=63 // pred_check_branch
          %445 = sbr.rel (%p443) target = $region72
        $region71: #{sa_routing_block.1} parent=63 // pred_region
          %446 = dma.done %s439, 768
        $region72: #{sa_routing_block.1} parent=63 // pred_fallthru
          _
        // Predicated region
        $region73: #{sa_routing_block.1} parent=63 // pred_check
          %p447 = pneg %p152
        $region74: #{sa_routing_block.1} parent=63 // pred_check_branch
          %449 = sbr.rel (%p447) target = $region76
        $region75: #{sa_routing_block.1} parent=63 // pred_region
          %450 = dma.done [#allocation6], 512
        $region76: #{sa_routing_block.1} parent=63 // pred_fallthru
          _
        // Predicated region
        $region77: #{sa_routing_block.1} parent=63 // pred_check
          %p451 = pneg %p194
        $region78: #{sa_routing_block.1} parent=63 // pred_check_branch
          %453 = sbr.rel (%p451) target = $region80
        $region79: #{sa_routing_block.1} parent=63 // pred_region
          %454 = dma.done [#allocation9], 512
        $region80: #{sa_routing_block.1} parent=63 // pred_fallthru
          _
        %p455 = scmp.lt.s32.totalorder %s32, 1
        %s456 = scalar_select %p455, %s32, 1
        %s457 = smul.addr %s456, 2
        %s458 = smul.addr %s457, 8
        %s459 = scalar_lea.vmem %s0, %s458
        %p460 = pneg %p53
        %p461 = pneg %p50
        %p462 = scmp.lt.s32.totalorder %s32, 1
        %s463 = scalar_select %p462, %s32, 1
        %s464 = smul.addr %s463, 2
        %s465 = smul.addr %s464, 8
        %s466 = scalar_lea.vmem %s1, %s465
        %p467 = pneg %p79
        %p468 = pneg %p76
        %s469 = sand.u32 %s92, 1
        %s470 = scalar_lea.sflag [#allocation3], %s469
        %s471 = sand.u32 %s92, 1
        %s472 = smul.addr %s471, 16
        %s473 = scalar_lea.vmem [#allocation2], %s472
        %p474 = pneg %p105
        %p475 = pneg %p102
        %s476 = sand.u32 %s32, 1
        %s477 = scalar_lea.sflag [#allocation6], %s476
        %s478 = sand.u32 %s118, 1
        %s479 = smul.addr %s478, 48
        %s480 = scalar_lea.vmem [#allocation5], %s479
        %p481 = pneg %p131
        %p482 = pneg %p128
        %p483 = pneg %p152
        %p484 = pneg %p149
        %p485 = pneg %p173
        %p486 = pneg %p170
        %p487 = pneg %p194
        %p488 = pneg %p191
        %p489 = pneg %p215
        %p490 = pneg %p212
        %p491 = pneg %p236
        %p492 = pneg %p233
        %p493 = pneg %p257
        %p494 = pneg %p254
        %p495 = pneg %p278
        %p496 = pneg %p275
        %p497 = pneg %p304
        %p498 = pneg %p301
        %s499 = sand.u32 %s291, 1
        %s500 = scalar_lea.sflag [#allocation4], %s499
        %s501 = sand.u32 %s291, 1
        %s502 = smul.addr %s501, 16
        %s503 = scalar_lea.vmem [#allocation10], %s502
        %p504 = scmp.lt.s32.totalorder %s32, 1
        %s505 = scalar_select %p504, %s32, 1
        %s506 = smul.addr %s505, 2
        %s507 = smul.addr %s506, 8
        %s508 = scalar_lea.vmem %s0, %s507
        %p509 = scmp.lt.s32.totalorder %s32, 1
        %s510 = scalar_select %p509, %s32, 1
        %s511 = smul.addr %s510, 2
        %s512 = smul.addr %s511, 8
        %s513 = scalar_lea.vmem %s1, %s512
        %v514 = vld [vmem:[%s508] sm:$0xff]
        %v515 = vld [vmem:[%s508 + $0x8] sm:$0xff]
        %v516 = vld [vmem:[%s513] sm:$0xff]
        %v517 = vld [vmem:[%s513 + $0x8] sm:$0xff]
        %v518 = vld [vmem:[%s433] sm:$0xff]
        %v519 = vld [vmem:[%s433 + $0x8] sm:$0xff]
        %v520 = vld [vmem:[%s442] sm:$0xff]
        %v521 = vld [vmem:[%s442 + $0x8] sm:$0xff]
        %v522 = vld [vmem:[%s442 + $0x10] sm:$0xff]
        %v523 = vld [vmem:[%s442 + $0x18] sm:$0xff]
        %v524 = vld [vmem:[%s442 + $0x20] sm:$0xff]
        %v525 = vld [vmem:[%s442 + $0x28] sm:$0xff]
        %vm526 = vcmask 261120
        %v527 = vsel %vm526, %v514, 0.0
        %v528 = vsel %vm526, %v515, 0.0
        %v529 = vadd.f32 %v527, %v528
        %v530 = vrot.slane %v529, 4
        %v531 = vadd.f32 %v529, %v530
        %v532 = vrot.slane %v531, 2
        %v533 = vadd.f32 %v531, %v532
        %v534 = vrot.slane %v533, 1
        %v535 = vadd.f32 %v533, %v534
        %v536 = vrcp.pop 16.0
        %v537 = vmul.f32 %v535, %v536
        %v538 = vld [vmem:[%s8] sm:$0xff]
        %v539 = vld [vmem:[%s8 + $0x8] sm:$0xff]
        %v540 = vld [vmem:[%s8 + $0x10] sm:$0xff]
        %v541 = vld [vmem:[%s8 + $0x18] sm:$0xff]
        %v543 = vsel %vm526, %v537, 0
        %545 = vmatprep.subr.mxu0 0.0
        %546 = vmatpush1.msra.mxu0 0.0
        %547 = vmatprep.subr.mxu0 0.0
        %548 = vmatpush1.msra.mxu0 0.0
        %549 = vmatprep.subr.mxu0 0.0
        %550 = vmatpush1.msra.mxu0 0.0
        %551 = vmatprep.subr.mxu0 0.0
        %552 = vmatpush1.msra.mxu0 0.0
        %553 = vmatprep.subr.mxu0 0.0
        %554 = vmatpush1.msra.mxu0 0.0
        %555 = vmatprep.subr.mxu0 0.0
        %556 = vmatpush1.msra.mxu0 0.0
        %557 = vmatprep.subr.mxu0 0.0
        %558 = vmatpush1.msra.mxu0 0.0
        %559 = vmatprep.subr.mxu0 0.0
        %560 = vmatpush1.msra.mxu0 0.0
        %561 = vmatprep.subr.mxu0 0.0
        %562 = vmatpush1.msra.mxu0 0.0
        %563 = vmatprep.subr.mxu0 0.0
        %564 = vmatpush1.msra.mxu0 0.0
        %565 = vmatprep.subr.mxu0 0.0
        %566 = vmatpush1.msra.mxu0 0.0
        %567 = vmatprep.subr.mxu0 0.0
        %568 = vmatpush1.msra.mxu0 0.0
        %569 = vmatprep.subr.mxu0 0.0
        %570 = vmatpush1.msra.mxu0 %v541
        %571 = vmatprep.subr.mxu0 0.0
        %572 = vmatpush1.msra.mxu0 %v540
        %573 = vmatprep.subr.mxu0 0.0
        %574 = vmatpush1.msra.mxu0 %v539
        %575 = vmatprep.subr.mxu0 0.0
        %576 = vmatpush1.msra.mxu0 %v538
        %577 = vmatprep.subr.mxu0 0.0
        %578 = vmatpush2.msra.mxu0 0.0
        %579 = vmatprep.subr.mxu0 0.0
        %580 = vmatpush2.msra.mxu0 0.0
        %581 = vmatprep.subr.mxu0 0.0
        %582 = vmatpush2.msra.mxu0 0.0
        %583 = vmatprep.subr.mxu0 0.0
        %584 = vmatpush2.msra.mxu0 0.0
        %585 = vmatprep.subr.mxu0 0.0
        %586 = vmatpush2.msra.mxu0 0.0
        %587 = vmatprep.subr.mxu0 0.0
        %588 = vmatpush2.msra.mxu0 0.0
        %589 = vmatprep.subr.mxu0 0.0
        %590 = vmatpush2.msra.mxu0 0.0
        %591 = vmatprep.subr.mxu0 0.0
        %592 = vmatpush2.msra.mxu0 0.0
        %593 = vmatprep.subr.mxu0 0.0
        %594 = vmatpush2.msra.mxu0 0.0
        %595 = vmatprep.subr.mxu0 0.0
        %596 = vmatpush2.msra.mxu0 0.0
        %597 = vmatprep.subr.mxu0 0.0
        %598 = vmatpush2.msra.mxu0 0.0
        %599 = vmatprep.subr.mxu0 0.0
        %600 = vmatpush2.msra.mxu0 0.0
        %601 = vmatprep.subr.mxu0 0.0
        %602 = vmatpush2.msra.mxu0 0.0
        %603 = vmatprep.subr.mxu0 0.0
        %604 = vmatpush2.msra.mxu0 0.0
        %605 = vmatprep.subr.mxu0 0.0
        %606 = vmatpush2.msra.mxu0 0.0
        %607 = vmatprep.subr.mxu0 0.0
        %608 = vmatpush2.msra.mxu0 0.0
        %609 = vmatprep.mubr.f32.mxu0 0.0
        %610 = vmatmul.mubr.f32.gmra.mxu0 %v543
        %v611 = vpop.f32.mrf.mxu0
        %v612 = vadd.f32 0.0, %v611
        %v613 = vpop.f32.mrf.mxu0
        %614 = vdwg.mxu0
        %v615 = vmax.f32 %v612, 0.0
        %v616 = vld [vmem:[%s9] sm:$0xff]
        %v617 = vld [vmem:[%s9 + $0x8] sm:$0xff]
        %v618 = vld [vmem:[%s10] sm:$0x1]
        %vm619 = vcmask 130048
        %v621 = vsel %vm619, %v615, 0
        %623 = vmatprep.subr.mxu0 0.0
        %624 = vmatpush1.msra.mxu0 0.0
        %625 = vmatprep.subr.mxu0 0.0
        %626 = vmatpush1.msra.mxu0 0.0
        %627 = vmatprep.subr.mxu0 0.0
        %628 = vmatpush1.msra.mxu0 0.0
        %629 = vmatprep.subr.mxu0 0.0
        %630 = vmatpush1.msra.mxu0 0.0
        %631 = vmatprep.subr.mxu0 0.0
        %632 = vmatpush1.msra.mxu0 0.0
        %633 = vmatprep.subr.mxu0 0.0
        %634 = vmatpush1.msra.mxu0 0.0
        %635 = vmatprep.subr.mxu0 0.0
        %636 = vmatpush1.msra.mxu0 0.0
        %637 = vmatprep.subr.mxu0 0.0
        %638 = vmatpush1.msra.mxu0 0.0
        %639 = vmatprep.subr.mxu0 0.0
        %640 = vmatpush1.msra.mxu0 0.0
        %641 = vmatprep.subr.mxu0 0.0
        %642 = vmatpush1.msra.mxu0 0.0
        %643 = vmatprep.subr.mxu0 0.0
        %644 = vmatpush1.msra.mxu0 0.0
        %645 = vmatprep.subr.mxu0 0.0
        %646 = vmatpush1.msra.mxu0 0.0
        %647 = vmatprep.subr.mxu0 0.0
        %648 = vmatpush1.msra.mxu0 0.0
        %649 = vmatprep.subr.mxu0 0.0
        %650 = vmatpush1.msra.mxu0 0.0
        %651 = vmatprep.subr.mxu0 0.0
        %652 = vmatpush1.msra.mxu0 %v617
        %653 = vmatprep.subr.mxu0 0.0
        %654 = vmatpush1.msra.mxu0 %v616
        %655 = vmatprep.subr.mxu0 0.0
        %656 = vmatpush2.msra.mxu0 0.0
        %657 = vmatprep.subr.mxu0 0.0
        %658 = vmatpush2.msra.mxu0 0.0
        %659 = vmatprep.subr.mxu0 0.0
        %660 = vmatpush2.msra.mxu0 0.0
        %661 = vmatprep.subr.mxu0 0.0
        %662 = vmatpush2.msra.mxu0 0.0
        %663 = vmatprep.subr.mxu0 0.0
        %664 = vmatpush2.msra.mxu0 0.0
        %665 = vmatprep.subr.mxu0 0.0
        %666 = vmatpush2.msra.mxu0 0.0
        %667 = vmatprep.subr.mxu0 0.0
        %668 = vmatpush2.msra.mxu0 0.0
        %669 = vmatprep.subr.mxu0 0.0
        %670 = vmatpush2.msra.mxu0 0.0
        %671 = vmatprep.subr.mxu0 0.0
        %672 = vmatpush2.msra.mxu0 0.0
        %673 = vmatprep.subr.mxu0 0.0
        %674 = vmatpush2.msra.mxu0 0.0
        %675 = vmatprep.subr.mxu0 0.0
        %676 = vmatpush2.msra.mxu0 0.0
        %677 = vmatprep.subr.mxu0 0.0
        %678 = vmatpush2.msra.mxu0 0.0
        %679 = vmatprep.subr.mxu0 0.0
        %680 = vmatpush2.msra.mxu0 0.0
        %681 = vmatprep.subr.mxu0 0.0
        %682 = vmatpush2.msra.mxu0 0.0
        %683 = vmatprep.subr.mxu0 0.0
        %684 = vmatpush2.msra.mxu0 0.0
        %685 = vmatprep.subr.mxu0 0.0
        %686 = vmatpush2.msra.mxu0 0.0
        %687 = vmatprep.mubr.f32.mxu0 0.0
        %688 = vmatmul.mubr.f32.gmra.mxu0 %v621
        %v689 = vpop.f32.mrf.mxu0
        %v690 = vadd.f32 %v618, %v689
        %v691 = vpop.f32.mrf.mxu0
        %692 = vdwg.mxu0
        %vm693 = vcmask 16384
        %v694 = vsel %vm693, %v690, -inf
        %695 = vmax.xlane.f32.xlu0 %v694
        %v696 = vpop.xlane.xlu0 %695
        %v697 = vsub.f32 %v690, %v696
        %v698 = vmul.f32 %v697, 1.442695
        %v699 = vpow.pop %v698
        %v700 = vsel %vm693, %v699, 0.0
        %701 = vadd.xlane.f32.xlu0 %v700
        %v702 = vpop.xlane.xlu0 %701
        %v703 = vrcp.pop %v702
        %v704 = vmul.f32 %v699, %v703
        %v705 = vld [vmem:[#allocation7] sm:$0xff]
        %v706 = vld [vmem:[#allocation7 + $0x8] sm:$0xff]
        %v707 = vld [vmem:[#allocation7 + $0x10] sm:$0xff]
        %v708 = vld [vmem:[#allocation7 + $0x18] sm:$0xff]
        %v709 = vld [vmem:[%s5] sm:$0x1]
        %v711 = vlaneseq
        %v712 = vshrl.u32 %v711, 7
        %v713 = vsub.s32 0, %v712
        %v714 = vrot.slane %v709, %v713
        %v717 = vsel %vm526, %v514, 0
        %v720 = vsel %vm526, %v515, 0
        %722 = vmatprep.subr.mxu0 0.0
        %723 = vmatpush1.msra.mxu0 0.0
        %724 = vmatprep.subr.mxu0 0.0
        %725 = vmatpush1.msra.mxu0 0.0
        %726 = vmatprep.subr.mxu0 0.0
        %727 = vmatpush1.msra.mxu0 0.0
        %728 = vmatprep.subr.mxu0 0.0
        %729 = vmatpush1.msra.mxu0 0.0
        %730 = vmatprep.subr.mxu0 0.0
        %731 = vmatpush1.msra.mxu0 0.0
        %732 = vmatprep.subr.mxu0 0.0
        %733 = vmatpush1.msra.mxu0 0.0
        %734 = vmatprep.subr.mxu0 0.0
        %735 = vmatpush1.msra.mxu0 0.0
        %736 = vmatprep.subr.mxu0 0.0
        %737 = vmatpush1.msra.mxu0 0.0
        %738 = vmatprep.subr.mxu0 0.0
        %739 = vmatpush1.msra.mxu0 0.0
        %740 = vmatprep.subr.mxu0 0.0
        %741 = vmatpush1.msra.mxu0 0.0
        %742 = vmatprep.subr.mxu0 0.0
        %743 = vmatpush1.msra.mxu0 0.0
        %744 = vmatprep.subr.mxu0 0.0
        %745 = vmatpush1.msra.mxu0 0.0
        %746 = vmatprep.subr.mxu0 0.0
        %747 = vmatpush1.msra.mxu0 %v708
        %748 = vmatprep.subr.mxu0 0.0
        %749 = vmatpush1.msra.mxu0 %v707
        %750 = vmatprep.subr.mxu0 0.0
        %751 = vmatpush1.msra.mxu0 %v706
        %752 = vmatprep.subr.mxu0 0.0
        %753 = vmatpush1.msra.mxu0 %v705
        %754 = vmatprep.subr.mxu0 0.0
        %755 = vmatpush2.msra.mxu0 0.0
        %756 = vmatprep.subr.mxu0 0.0
        %757 = vmatpush2.msra.mxu0 0.0
        %758 = vmatprep.subr.mxu0 0.0
        %759 = vmatpush2.msra.mxu0 0.0
        %760 = vmatprep.subr.mxu0 0.0
        %761 = vmatpush2.msra.mxu0 0.0
        %762 = vmatprep.subr.mxu0 0.0
        %763 = vmatpush2.msra.mxu0 0.0
        %764 = vmatprep.subr.mxu0 0.0
        %765 = vmatpush2.msra.mxu0 0.0
        %766 = vmatprep.subr.mxu0 0.0
        %767 = vmatpush2.msra.mxu0 0.0
        %768 = vmatprep.subr.mxu0 0.0
        %769 = vmatpush2.msra.mxu0 0.0
        %770 = vmatprep.subr.mxu0 0.0
        %771 = vmatpush2.msra.mxu0 0.0
        %772 = vmatprep.subr.mxu0 0.0
        %773 = vmatpush2.msra.mxu0 0.0
        %774 = vmatprep.subr.mxu0 0.0
        %775 = vmatpush2.msra.mxu0 0.0
        %776 = vmatprep.subr.mxu0 0.0
        %777 = vmatpush2.msra.mxu0 0.0
        %778 = vmatprep.subr.mxu0 0.0
        %779 = vmatpush2.msra.mxu0 0.0
        %780 = vmatprep.subr.mxu0 0.0
        %781 = vmatpush2.msra.mxu0 0.0
        %782 = vmatprep.subr.mxu0 0.0
        %783 = vmatpush2.msra.mxu0 0.0
        %784 = vmatprep.subr.mxu0 0.0
        %785 = vmatpush2.msra.mxu0 0.0
        %786 = vmatprep.mubr.f32.mxu0 0.0
        %787 = vmatmul.mubr.f32.gmra.mxu0 %v717
        %v788 = vpop.f32.mrf.mxu0
        %v789 = vadd.f32 %v714, %v788
        %v790 = vpop.f32.mrf.mxu0
        %791 = vmatprep.mubr.f32.mxu0 0.0
        %792 = vmatmul.mubr.f32.gmra.mxu0 %v720
        %v793 = vpop.f32.mrf.mxu0
        %v794 = vadd.f32 %v714, %v793
        %v795 = vpop.f32.mrf.mxu0
        %796 = vdwg.mxu0
        %801 = vrot.lane.b32.xlu0 %v705, 96
        %v802 = vpop.permute.xlu0 %801
        %803 = vrot.lane.b32.xlu0 %v706, 96
        %v804 = vpop.permute.xlu0 %803
        %805 = vrot.lane.b32.xlu0 %v707, 96
        %v806 = vpop.permute.xlu0 %805
        %807 = vrot.lane.b32.xlu0 %v708, 96
        %v808 = vpop.permute.xlu0 %807
        %813 = vrot.lane.b32.xlu0 %v714, 96
        %v814 = vpop.permute.xlu0 %813
        %v817 = vsel %vm526, %v516, 0
        %v820 = vsel %vm526, %v517, 0
        %822 = vmatprep.subr.mxu0 0.0
        %823 = vmatpush1.msra.mxu0 0.0
        %824 = vmatprep.subr.mxu0 0.0
        %825 = vmatpush1.msra.mxu0 0.0
        %826 = vmatprep.subr.mxu0 0.0
        %827 = vmatpush1.msra.mxu0 0.0
        %828 = vmatprep.subr.mxu0 0.0
        %829 = vmatpush1.msra.mxu0 0.0
        %830 = vmatprep.subr.mxu0 0.0
        %831 = vmatpush1.msra.mxu0 0.0
        %832 = vmatprep.subr.mxu0 0.0
        %833 = vmatpush1.msra.mxu0 0.0
        %834 = vmatprep.subr.mxu0 0.0
        %835 = vmatpush1.msra.mxu0 0.0
        %836 = vmatprep.subr.mxu0 0.0
        %837 = vmatpush1.msra.mxu0 0.0
        %838 = vmatprep.subr.mxu0 0.0
        %839 = vmatpush1.msra.mxu0 0.0
        %840 = vmatprep.subr.mxu0 0.0
        %841 = vmatpush1.msra.mxu0 0.0
        %842 = vmatprep.subr.mxu0 0.0
        %843 = vmatpush1.msra.mxu0 0.0
        %844 = vmatprep.subr.mxu0 0.0
        %845 = vmatpush1.msra.mxu0 0.0
        %846 = vmatprep.subr.mxu0 0.0
        %847 = vmatpush1.msra.mxu0 %v808
        %848 = vmatprep.subr.mxu0 0.0
        %849 = vmatpush1.msra.mxu0 %v806
        %850 = vmatprep.subr.mxu0 0.0
        %851 = vmatpush1.msra.mxu0 %v804
        %852 = vmatprep.subr.mxu0 0.0
        %853 = vmatpush1.msra.mxu0 %v802
        %854 = vmatprep.subr.mxu0 0.0
        %855 = vmatpush2.msra.mxu0 0.0
        %856 = vmatprep.subr.mxu0 0.0
        %857 = vmatpush2.msra.mxu0 0.0
        %858 = vmatprep.subr.mxu0 0.0
        %859 = vmatpush2.msra.mxu0 0.0
        %860 = vmatprep.subr.mxu0 0.0
        %861 = vmatpush2.msra.mxu0 0.0
        %862 = vmatprep.subr.mxu0 0.0
        %863 = vmatpush2.msra.mxu0 0.0
        %864 = vmatprep.subr.mxu0 0.0
        %865 = vmatpush2.msra.mxu0 0.0
        %866 = vmatprep.subr.mxu0 0.0
        %867 = vmatpush2.msra.mxu0 0.0
        %868 = vmatprep.subr.mxu0 0.0
        %869 = vmatpush2.msra.mxu0 0.0
        %870 = vmatprep.subr.mxu0 0.0
        %871 = vmatpush2.msra.mxu0 0.0
        %872 = vmatprep.subr.mxu0 0.0
        %873 = vmatpush2.msra.mxu0 0.0
        %874 = vmatprep.subr.mxu0 0.0
        %875 = vmatpush2.msra.mxu0 0.0
        %876 = vmatprep.subr.mxu0 0.0
        %877 = vmatpush2.msra.mxu0 0.0
        %878 = vmatprep.subr.mxu0 0.0
        %879 = vmatpush2.msra.mxu0 0.0
        %880 = vmatprep.subr.mxu0 0.0
        %881 = vmatpush2.msra.mxu0 0.0
        %882 = vmatprep.subr.mxu0 0.0
        %883 = vmatpush2.msra.mxu0 0.0
        %884 = vmatprep.subr.mxu0 0.0
        %885 = vmatpush2.msra.mxu0 0.0
        %886 = vmatprep.mubr.f32.mxu0 0.0
        %887 = vmatmul.mubr.f32.gmra.mxu0 %v817
        %v888 = vpop.f32.mrf.mxu0
        %v889 = vadd.f32 %v814, %v888
        %v890 = vpop.f32.mrf.mxu0
        %891 = vmatprep.mubr.f32.mxu0 0.0
        %892 = vmatmul.mubr.f32.gmra.mxu0 %v820
        %v893 = vpop.f32.mrf.mxu0
        %v894 = vadd.f32 %v814, %v893
        %v895 = vpop.f32.mrf.mxu0
        %896 = vdwg.mxu0
        %897 = vrot.lane.b32.xlu0 %v705, 64
        %v898 = vpop.permute.xlu0 %897
        %899 = vrot.lane.b32.xlu0 %v706, 64
        %v900 = vpop.permute.xlu0 %899
        %901 = vrot.lane.b32.xlu0 %v707, 64
        %v902 = vpop.permute.xlu0 %901
        %903 = vrot.lane.b32.xlu0 %v708, 64
        %v904 = vpop.permute.xlu0 %903
        %909 = vrot.lane.b32.xlu0 %v714, 64
        %v910 = vpop.permute.xlu0 %909
        %v913 = vsel %vm526, %v518, 0
        %v916 = vsel %vm526, %v519, 0
        %918 = vmatprep.subr.mxu0 0.0
        %919 = vmatpush1.msra.mxu0 0.0
        %920 = vmatprep.subr.mxu0 0.0
        %921 = vmatpush1.msra.mxu0 0.0
        %922 = vmatprep.subr.mxu0 0.0
        %923 = vmatpush1.msra.mxu0 0.0
        %924 = vmatprep.subr.mxu0 0.0
        %925 = vmatpush1.msra.mxu0 0.0
        %926 = vmatprep.subr.mxu0 0.0
        %927 = vmatpush1.msra.mxu0 0.0
        %928 = vmatprep.subr.mxu0 0.0
        %929 = vmatpush1.msra.mxu0 0.0
        %930 = vmatprep.subr.mxu0 0.0
        %931 = vmatpush1.msra.mxu0 0.0
        %932 = vmatprep.subr.mxu0 0.0
        %933 = vmatpush1.msra.mxu0 0.0
        %934 = vmatprep.subr.mxu0 0.0
        %935 = vmatpush1.msra.mxu0 0.0
        %936 = vmatprep.subr.mxu0 0.0
        %937 = vmatpush1.msra.mxu0 0.0
        %938 = vmatprep.subr.mxu0 0.0
        %939 = vmatpush1.msra.mxu0 0.0
        %940 = vmatprep.subr.mxu0 0.0
        %941 = vmatpush1.msra.mxu0 0.0
        %942 = vmatprep.subr.mxu0 0.0
        %943 = vmatpush1.msra.mxu0 %v904
        %944 = vmatprep.subr.mxu0 0.0
        %945 = vmatpush1.msra.mxu0 %v902
        %946 = vmatprep.subr.mxu0 0.0
        %947 = vmatpush1.msra.mxu0 %v900
        %948 = vmatprep.subr.mxu0 0.0
        %949 = vmatpush1.msra.mxu0 %v898
        %950 = vmatprep.subr.mxu0 0.0
        %951 = vmatpush2.msra.mxu0 0.0
        %952 = vmatprep.subr.mxu0 0.0
        %953 = vmatpush2.msra.mxu0 0.0
        %954 = vmatprep.subr.mxu0 0.0
        %955 = vmatpush2.msra.mxu0 0.0
        %956 = vmatprep.subr.mxu0 0.0
        %957 = vmatpush2.msra.mxu0 0.0
        %958 = vmatprep.subr.mxu0 0.0
        %959 = vmatpush2.msra.mxu0 0.0
        %960 = vmatprep.subr.mxu0 0.0
        %961 = vmatpush2.msra.mxu0 0.0
        %962 = vmatprep.subr.mxu0 0.0
        %963 = vmatpush2.msra.mxu0 0.0
        %964 = vmatprep.subr.mxu0 0.0
        %965 = vmatpush2.msra.mxu0 0.0
        %966 = vmatprep.subr.mxu0 0.0
        %967 = vmatpush2.msra.mxu0 0.0
        %968 = vmatprep.subr.mxu0 0.0
        %969 = vmatpush2.msra.mxu0 0.0
        %970 = vmatprep.subr.mxu0 0.0
        %971 = vmatpush2.msra.mxu0 0.0
        %972 = vmatprep.subr.mxu0 0.0
        %973 = vmatpush2.msra.mxu0 0.0
        %974 = vmatprep.subr.mxu0 0.0
        %975 = vmatpush2.msra.mxu0 0.0
        %976 = vmatprep.subr.mxu0 0.0
        %977 = vmatpush2.msra.mxu0 0.0
        %978 = vmatprep.subr.mxu0 0.0
        %979 = vmatpush2.msra.mxu0 0.0
        %980 = vmatprep.subr.mxu0 0.0
        %981 = vmatpush2.msra.mxu0 0.0
        %982 = vmatprep.mubr.f32.mxu0 0.0
        %983 = vmatmul.mubr.f32.gmra.mxu0 %v913
        %v984 = vpop.f32.mrf.mxu0
        %v985 = vadd.f32 %v910, %v984
        %v986 = vpop.f32.mrf.mxu0
        %987 = vmatprep.mubr.f32.mxu0 0.0
        %988 = vmatmul.mubr.f32.gmra.mxu0 %v916
        %v989 = vpop.f32.mrf.mxu0
        %v990 = vadd.f32 %v910, %v989
        %v991 = vpop.f32.mrf.mxu0
        %992 = vdwg.mxu0
        %vm993 = vcmask 64512
        %v995 = vsel %vm993, %v985, 0
        %v998 = vsel %vm993, %v990, 0
        %v1001 = vsel %vm993, %v889, 0
        %v1004 = vsel %vm993, %v894, 0
        %1006 = vmatprep.subr.mxu0 0.0
        %1007 = vmatpush1.xpose.msra.mxu0 0.0
        %1008 = vmatprep.subr.mxu0 0.0
        %1009 = vmatpush1.xpose.msra.mxu0 0.0
        %1010 = vmatprep.subr.mxu0 0.0
        %1011 = vmatpush1.xpose.msra.mxu0 0.0
        %1012 = vmatprep.subr.mxu0 0.0
        %1013 = vmatpush1.xpose.msra.mxu0 0.0
        %1014 = vmatprep.subr.mxu0 0.0
        %1015 = vmatpush1.xpose.msra.mxu0 0.0
        %1016 = vmatprep.subr.mxu0 0.0
        %1017 = vmatpush1.xpose.msra.mxu0 0.0
        %1018 = vmatprep.subr.mxu0 0.0
        %1019 = vmatpush1.xpose.msra.mxu0 0.0
        %1020 = vmatprep.subr.mxu0 0.0
        %1021 = vmatpush1.xpose.msra.mxu0 0.0
        %1022 = vmatprep.subr.mxu0 0.0
        %1023 = vmatpush1.xpose.msra.mxu0 0.0
        %1024 = vmatprep.subr.mxu0 0.0
        %1025 = vmatpush1.xpose.msra.mxu0 0.0
        %1026 = vmatprep.subr.mxu0 0.0
        %1027 = vmatpush1.xpose.msra.mxu0 0.0
        %1028 = vmatprep.subr.mxu0 0.0
        %1029 = vmatpush1.xpose.msra.mxu0 0.0
        %1030 = vmatprep.subr.mxu0 0.0
        %1031 = vmatpush1.xpose.msra.mxu0 0.0
        %1032 = vmatprep.subr.mxu0 0.0
        %1033 = vmatpush1.xpose.msra.mxu0 0.0
        %1034 = vmatprep.subr.mxu0 0.0
        %1035 = vmatpush1.xpose.msra.mxu0 %v1004
        %1036 = vmatprep.subr.mxu0 0.0
        %1037 = vmatpush1.xpose.msra.mxu0 %v1001
        %1038 = vmatprep.subr.mxu0 0.0
        %1039 = vmatpush2.xpose.msra.mxu0 0.0
        %1040 = vmatprep.subr.mxu0 0.0
        %1041 = vmatpush2.xpose.msra.mxu0 0.0
        %1042 = vmatprep.subr.mxu0 0.0
        %1043 = vmatpush2.xpose.msra.mxu0 0.0
        %1044 = vmatprep.subr.mxu0 0.0
        %1045 = vmatpush2.xpose.msra.mxu0 0.0
        %1046 = vmatprep.subr.mxu0 0.0
        %1047 = vmatpush2.xpose.msra.mxu0 0.0
        %1048 = vmatprep.subr.mxu0 0.0
        %1049 = vmatpush2.xpose.msra.mxu0 0.0
        %1050 = vmatprep.subr.mxu0 0.0
        %1051 = vmatpush2.xpose.msra.mxu0 0.0
        %1052 = vmatprep.subr.mxu0 0.0
        %1053 = vmatpush2.xpose.msra.mxu0 0.0
        %1054 = vmatprep.subr.mxu0 0.0
        %1055 = vmatpush2.xpose.msra.mxu0 0.0
        %1056 = vmatprep.subr.mxu0 0.0
        %1057 = vmatpush2.xpose.msra.mxu0 0.0
        %1058 = vmatprep.subr.mxu0 0.0
        %1059 = vmatpush2.xpose.msra.mxu0 0.0
        %1060 = vmatprep.subr.mxu0 0.0
        %1061 = vmatpush2.xpose.msra.mxu0 0.0
        %1062 = vmatprep.subr.mxu0 0.0
        %1063 = vmatpush2.xpose.msra.mxu0 0.0
        %1064 = vmatprep.subr.mxu0 0.0
        %1065 = vmatpush2.xpose.msra.mxu0 0.0
        %1066 = vmatprep.subr.mxu0 0.0
        %1067 = vmatpush2.xpose.msra.mxu0 0.0
        %1068 = vmatprep.subr.mxu0 0.0
        %1069 = vmatpush2.xpose.msra.mxu0 0.0
        %1070 = vmatprep.mubr.f32.mxu0 0.0
        %1071 = vmatmul.mubr.f32.gmra.mxu0 %v995
        %v1072 = vpop.f32.mrf.mxu0
        %v1073 = vadd.f32 0.0, %v1072
        %v1074 = vpop.f32.mrf.mxu0
        %1075 = vmatprep.mubr.f32.mxu0 0.0
        %1076 = vmatmul.mubr.f32.gmra.mxu0 %v998
        %v1077 = vpop.f32.mrf.mxu0
        %v1078 = vadd.f32 0.0, %v1077
        %v1079 = vpop.f32.mrf.mxu0
        %1080 = vdwg.mxu0
        %v1081 = vmul.f32 %v1073, 0.35355338
        %v1082 = vmul.f32 %v1078, 0.35355338
        %v1083 = vadd.f32 %v1081, %v520
        %v1084 = vadd.f32 %v1082, %v521
        %v1085 = vadd.f32 %v1081, %v522
        %v1086 = vadd.f32 %v1082, %v523
        %v1087 = vadd.f32 %v1081, %v524
        %v1088 = vadd.f32 %v1082, %v525
        %v1089 = vsel %vm619, %v1083, -inf
        %1090 = vmax.xlane.f32.xlu0 %v1089
        %v1091 = vpop.xlane.xlu0 %1090
        %v1092 = vsel %vm619, %v1084, -inf
        %1093 = vmax.xlane.f32.xlu0 %v1092
        %v1094 = vpop.xlane.xlu0 %1093
        %v1095 = vsel %vm619, %v1085, -inf
        %1096 = vmax.xlane.f32.xlu0 %v1095
        %v1097 = vpop.xlane.xlu0 %1096
        %v1098 = vsel %vm619, %v1086, -inf
        %1099 = vmax.xlane.f32.xlu0 %v1098
        %v1100 = vpop.xlane.xlu0 %1099
        %v1101 = vsel %vm619, %v1087, -inf
        %1102 = vmax.xlane.f32.xlu0 %v1101
        %v1103 = vpop.xlane.xlu0 %1102
        %v1104 = vsel %vm619, %v1088, -inf
        %1105 = vmax.xlane.f32.xlu0 %v1104
        %v1106 = vpop.xlane.xlu0 %1105
        %v1107 = vsub.f32 %v1083, %v1091
        %v1108 = vsub.f32 %v1084, %v1094
        %v1109 = vsub.f32 %v1085, %v1097
        %v1110 = vsub.f32 %v1086, %v1100
        %v1111 = vsub.f32 %v1087, %v1103
        %v1112 = vsub.f32 %v1088, %v1106
        %v1113 = vmul.f32 %v1107, 1.442695
        %v1114 = vpow.pop %v1113
        %v1115 = vmul.f32 %v1108, 1.442695
        %v1116 = vpow.pop %v1115
        %v1117 = vmul.f32 %v1109, 1.442695
        %v1118 = vpow.pop %v1117
        %v1119 = vmul.f32 %v1110, 1.442695
        %v1120 = vpow.pop %v1119
        %v1121 = vmul.f32 %v1111, 1.442695
        %v1122 = vpow.pop %v1121
        %v1123 = vmul.f32 %v1112, 1.442695
        %v1124 = vpow.pop %v1123
        %v1125 = vsel %vm619, %v1114, 0.0
        %1126 = vadd.xlane.f32.xlu0 %v1125
        %v1127 = vpop.xlane.xlu0 %1126
        %v1128 = vsel %vm619, %v1116, 0.0
        %1129 = vadd.xlane.f32.xlu0 %v1128
        %v1130 = vpop.xlane.xlu0 %1129
        %v1131 = vsel %vm619, %v1118, 0.0
        %1132 = vadd.xlane.f32.xlu0 %v1131
        %v1133 = vpop.xlane.xlu0 %1132
        %v1134 = vsel %vm619, %v1120, 0.0
        %1135 = vadd.xlane.f32.xlu0 %v1134
        %v1136 = vpop.xlane.xlu0 %1135
        %v1137 = vsel %vm619, %v1122, 0.0
        %1138 = vadd.xlane.f32.xlu0 %v1137
        %v1139 = vpop.xlane.xlu0 %1138
        %v1140 = vsel %vm619, %v1124, 0.0
        %1141 = vadd.xlane.f32.xlu0 %v1140
        %v1142 = vpop.xlane.xlu0 %1141
        %v1143 = vrcp.pop %v1127
        %v1144 = vmul.f32 %v1114, %v1143
        %v1145 = vrcp.pop %v1130
        %v1146 = vmul.f32 %v1116, %v1145
        %v1147 = vrcp.pop %v1133
        %v1148 = vmul.f32 %v1118, %v1147
        %v1149 = vrcp.pop %v1136
        %v1150 = vmul.f32 %v1120, %v1149
        %v1151 = vrcp.pop %v1139
        %v1152 = vmul.f32 %v1122, %v1151
        %v1153 = vrcp.pop %v1142
        %v1154 = vmul.f32 %v1124, %v1153
        %s1156 = vtos %v704
        %v1157 = vstv %s1156
        %v1159 = vmul.f32 %v1157, %v1144
        %v1160 = vmul.f32 %v1157, %v1146
        %v1161 = vadd.f32 %v1159, 0.0
        %v1162 = vadd.f32 %v1160, 0.0
        %1163 = vrot.lane.b32.xlu0 %v704, 127
        %v1164 = vpop.permute.xlu0 %1163
        %s1165 = vtos %v1164
        %v1166 = vstv %s1165
        %v1168 = vmul.f32 %v1166, %v1148
        %v1169 = vmul.f32 %v1166, %v1150
        %v1170 = vadd.f32 %v1161, %v1168
        %v1171 = vadd.f32 %v1162, %v1169
        %1172 = vrot.lane.b32.xlu0 %v704, 126
        %v1173 = vpop.permute.xlu0 %1172
        %s1174 = vtos %v1173
        %v1175 = vstv %s1174
        %v1177 = vmul.f32 %v1175, %v1152
        %v1178 = vmul.f32 %v1175, %v1154
        %v1179 = vadd.f32 %v1170, %v1177
        %v1180 = vadd.f32 %v1171, %v1178
        %v1182 = vsel %vm619, %v1179, 0
        %v1185 = vsel %vm619, %v1180, 0
        %1187 = vmatprep.subr.mxu0 0.0
        %1188 = vmatpush1.msra.mxu0 0.0
        %1189 = vmatprep.subr.mxu0 0.0
        %1190 = vmatpush1.msra.mxu0 0.0
        %1191 = vmatprep.subr.mxu0 0.0
        %1192 = vmatpush1.msra.mxu0 0.0
        %1193 = vmatprep.subr.mxu0 0.0
        %1194 = vmatpush1.msra.mxu0 0.0
        %1195 = vmatprep.subr.mxu0 0.0
        %1196 = vmatpush1.msra.mxu0 0.0
        %1197 = vmatprep.subr.mxu0 0.0
        %1198 = vmatpush1.msra.mxu0 0.0
        %1199 = vmatprep.subr.mxu0 0.0
        %1200 = vmatpush1.msra.mxu0 0.0
        %1201 = vmatprep.subr.mxu0 0.0
        %1202 = vmatpush1.msra.mxu0 0.0
        %1203 = vmatprep.subr.mxu0 0.0
        %1204 = vmatpush1.msra.mxu0 0.0
        %1205 = vmatprep.subr.mxu0 0.0
        %1206 = vmatpush1.msra.mxu0 0.0
        %1207 = vmatprep.subr.mxu0 0.0
        %1208 = vmatpush1.msra.mxu0 0.0
        %1209 = vmatprep.subr.mxu0 0.0
        %1210 = vmatpush1.msra.mxu0 0.0
        %1211 = vmatprep.subr.mxu0 0.0
        %1212 = vmatpush1.msra.mxu0 0.0
        %1213 = vmatprep.subr.mxu0 0.0
        %1214 = vmatpush1.msra.mxu0 0.0
        %1215 = vmatprep.subr.mxu0 0.0
        %1216 = vmatpush1.msra.mxu0 %v794
        %1217 = vmatprep.subr.mxu0 0.0
        %1218 = vmatpush1.msra.mxu0 %v789
        %1219 = vmatprep.subr.mxu0 0.0
        %1220 = vmatpush2.msra.mxu0 0.0
        %1221 = vmatprep.subr.mxu0 0.0
        %1222 = vmatpush2.msra.mxu0 0.0
        %1223 = vmatprep.subr.mxu0 0.0
        %1224 = vmatpush2.msra.mxu0 0.0
        %1225 = vmatprep.subr.mxu0 0.0
        %1226 = vmatpush2.msra.mxu0 0.0
        %1227 = vmatprep.subr.mxu0 0.0
        %1228 = vmatpush2.msra.mxu0 0.0
        %1229 = vmatprep.subr.mxu0 0.0
        %1230 = vmatpush2.msra.mxu0 0.0
        %1231 = vmatprep.subr.mxu0 0.0
        %1232 = vmatpush2.msra.mxu0 0.0
        %1233 = vmatprep.subr.mxu0 0.0
        %1234 = vmatpush2.msra.mxu0 0.0
        %1235 = vmatprep.subr.mxu0 0.0
        %1236 = vmatpush2.msra.mxu0 0.0
        %1237 = vmatprep.subr.mxu0 0.0
        %1238 = vmatpush2.msra.mxu0 0.0
        %1239 = vmatprep.subr.mxu0 0.0
        %1240 = vmatpush2.msra.mxu0 0.0
        %1241 = vmatprep.subr.mxu0 0.0
        %1242 = vmatpush2.msra.mxu0 0.0
        %1243 = vmatprep.subr.mxu0 0.0
        %1244 = vmatpush2.msra.mxu0 0.0
        %1245 = vmatprep.subr.mxu0 0.0
        %1246 = vmatpush2.msra.mxu0 0.0
        %1247 = vmatprep.subr.mxu0 0.0
        %1248 = vmatpush2.msra.mxu0 0.0
        %1249 = vmatprep.subr.mxu0 0.0
        %1250 = vmatpush2.msra.mxu0 0.0
        %1251 = vmatprep.mubr.f32.mxu0 0.0
        %1252 = vmatmul.mubr.f32.gmra.mxu0 %v1182
        %v1253 = vpop.f32.mrf.mxu0
        %v1254 = vadd.f32 0.0, %v1253
        %v1255 = vpop.f32.mrf.mxu0
        %1256 = vmatprep.mubr.f32.mxu0 0.0
        %1257 = vmatmul.mubr.f32.gmra.mxu0 %v1185
        %v1258 = vpop.f32.mrf.mxu0
        %v1259 = vadd.f32 0.0, %v1258
        %v1260 = vpop.f32.mrf.mxu0
        %1261 = vdwg.mxu0
        %v1262 = vld [vmem:[#allocation8] sm:$0xff]
        %1263 = vrot.lane.b32.xlu0 %v985, 120
        %v1264 = vpop.permute.xlu0 %1263
        %1265 = vrot.lane.b32.xlu0 %v990, 120
        %v1266 = vpop.permute.xlu0 %1265
        %1267 = vrot.lane.b32.xlu0 %v889, 120
        %v1268 = vpop.permute.xlu0 %1267
        %1269 = vrot.lane.b32.xlu0 %v894, 120
        %v1270 = vpop.permute.xlu0 %1269
        %v1271 = vsel %vm993, %v1264, 0
        %v1273 = vsel %vm993, %v1266, 0
        %v1275 = vsel %vm993, %v1268, 0
        %v1277 = vsel %vm993, %v1270, 0
        %1279 = vmatprep.subr.mxu0 0.0
        %1280 = vmatpush1.xpose.msra.mxu0 0.0
        %1281 = vmatprep.subr.mxu0 0.0
        %1282 = vmatpush1.xpose.msra.mxu0 0.0
        %1283 = vmatprep.subr.mxu0 0.0
        %1284 = vmatpush1.xpose.msra.mxu0 0.0
        %1285 = vmatprep.subr.mxu0 0.0
        %1286 = vmatpush1.xpose.msra.mxu0 0.0
        %1287 = vmatprep.subr.mxu0 0.0
        %1288 = vmatpush1.xpose.msra.mxu0 0.0
        %1289 = vmatprep.subr.mxu0 0.0
        %1290 = vmatpush1.xpose.msra.mxu0 0.0
        %1291 = vmatprep.subr.mxu0 0.0
        %1292 = vmatpush1.xpose.msra.mxu0 0.0
        %1293 = vmatprep.subr.mxu0 0.0
        %1294 = vmatpush1.xpose.msra.mxu0 0.0
        %1295 = vmatprep.subr.mxu0 0.0
        %1296 = vmatpush1.xpose.msra.mxu0 0.0
        %1297 = vmatprep.subr.mxu0 0.0
        %1298 = vmatpush1.xpose.msra.mxu0 0.0
        %1299 = vmatprep.subr.mxu0 0.0
        %1300 = vmatpush1.xpose.msra.mxu0 0.0
        %1301 = vmatprep.subr.mxu0 0.0
        %1302 = vmatpush1.xpose.msra.mxu0 0.0
        %1303 = vmatprep.subr.mxu0 0.0
        %1304 = vmatpush1.xpose.msra.mxu0 0.0
        %1305 = vmatprep.subr.mxu0 0.0
        %1306 = vmatpush1.xpose.msra.mxu0 0.0
        %1307 = vmatprep.subr.mxu0 0.0
        %1308 = vmatpush1.xpose.msra.mxu0 %v1277
        %1309 = vmatprep.subr.mxu0 0.0
        %1310 = vmatpush1.xpose.msra.mxu0 %v1275
        %1311 = vmatprep.subr.mxu0 0.0
        %1312 = vmatpush2.xpose.msra.mxu0 0.0
        %1313 = vmatprep.subr.mxu0 0.0
        %1314 = vmatpush2.xpose.msra.mxu0 0.0
        %1315 = vmatprep.subr.mxu0 0.0
        %1316 = vmatpush2.xpose.msra.mxu0 0.0
        %1317 = vmatprep.subr.mxu0 0.0
        %1318 = vmatpush2.xpose.msra.mxu0 0.0
        %1319 = vmatprep.subr.mxu0 0.0
        %1320 = vmatpush2.xpose.msra.mxu0 0.0
        %1321 = vmatprep.subr.mxu0 0.0
        %1322 = vmatpush2.xpose.msra.mxu0 0.0
        %1323 = vmatprep.subr.mxu0 0.0
        %1324 = vmatpush2.xpose.msra.mxu0 0.0
        %1325 = vmatprep.subr.mxu0 0.0
        %1326 = vmatpush2.xpose.msra.mxu0 0.0
        %1327 = vmatprep.subr.mxu0 0.0
        %1328 = vmatpush2.xpose.msra.mxu0 0.0
        %1329 = vmatprep.subr.mxu0 0.0
        %1330 = vmatpush2.xpose.msra.mxu0 0.0
        %1331 = vmatprep.subr.mxu0 0.0
        %1332 = vmatpush2.xpose.msra.mxu0 0.0
        %1333 = vmatprep.subr.mxu0 0.0
        %1334 = vmatpush2.xpose.msra.mxu0 0.0
        %1335 = vmatprep.subr.mxu0 0.0
        %1336 = vmatpush2.xpose.msra.mxu0 0.0
        %1337 = vmatprep.subr.mxu0 0.0
        %1338 = vmatpush2.xpose.msra.mxu0 0.0
        %1339 = vmatprep.subr.mxu0 0.0
        %1340 = vmatpush2.xpose.msra.mxu0 0.0
        %1341 = vmatprep.subr.mxu0 0.0
        %1342 = vmatpush2.xpose.msra.mxu0 0.0
        %1343 = vmatprep.mubr.f32.mxu0 0.0
        %1344 = vmatmul.mubr.f32.gmra.mxu0 %v1271
        %v1345 = vpop.f32.mrf.mxu0
        %v1346 = vadd.f32 0.0, %v1345
        %v1347 = vpop.f32.mrf.mxu0
        %1348 = vmatprep.mubr.f32.mxu0 0.0
        %1349 = vmatmul.mubr.f32.gmra.mxu0 %v1273
        %v1350 = vpop.f32.mrf.mxu0
        %v1351 = vadd.f32 0.0, %v1350
        %v1352 = vpop.f32.mrf.mxu0
        %1353 = vdwg.mxu0
        %v1354 = vmul.f32 %v1346, 0.35355338
        %v1355 = vmul.f32 %v1351, 0.35355338
        %v1356 = vadd.f32 %v1354, %v520
        %v1357 = vadd.f32 %v1355, %v521
        %v1358 = vadd.f32 %v1354, %v522
        %v1359 = vadd.f32 %v1355, %v523
        %v1360 = vadd.f32 %v1354, %v524
        %v1361 = vadd.f32 %v1355, %v525
        %v1362 = vsel %vm619, %v1356, -inf
        %1363 = vmax.xlane.f32.xlu0 %v1362
        %v1364 = vpop.xlane.xlu0 %1363
        %v1365 = vsel %vm619, %v1357, -inf
        %1366 = vmax.xlane.f32.xlu0 %v1365
        %v1367 = vpop.xlane.xlu0 %1366
        %v1368 = vsel %vm619, %v1358, -inf
        %1369 = vmax.xlane.f32.xlu0 %v1368
        %v1370 = vpop.xlane.xlu0 %1369
        %v1371 = vsel %vm619, %v1359, -inf
        %1372 = vmax.xlane.f32.xlu0 %v1371
        %v1373 = vpop.xlane.xlu0 %1372
        %v1374 = vsel %vm619, %v1360, -inf
        %1375 = vmax.xlane.f32.xlu0 %v1374
        %v1376 = vpop.xlane.xlu0 %1375
        %v1377 = vsel %vm619, %v1361, -inf
        %1378 = vmax.xlane.f32.xlu0 %v1377
        %v1379 = vpop.xlane.xlu0 %1378
        %v1380 = vsub.f32 %v1356, %v1364
        %v1381 = vsub.f32 %v1357, %v1367
        %v1382 = vsub.f32 %v1358, %v1370
        %v1383 = vsub.f32 %v1359, %v1373
        %v1384 = vsub.f32 %v1360, %v1376
        %v1385 = vsub.f32 %v1361, %v1379
        %v1386 = vmul.f32 %v1380, 1.442695
        %v1387 = vpow.pop %v1386
        %v1388 = vmul.f32 %v1381, 1.442695
        %v1389 = vpow.pop %v1388
        %v1390 = vmul.f32 %v1382, 1.442695
        %v1391 = vpow.pop %v1390
        %v1392 = vmul.f32 %v1383, 1.442695
        %v1393 = vpow.pop %v1392
        %v1394 = vmul.f32 %v1384, 1.442695
        %v1395 = vpow.pop %v1394
        %v1396 = vmul.f32 %v1385, 1.442695
        %v1397 = vpow.pop %v1396
        %v1398 = vsel %vm619, %v1387, 0.0
        %1399 = vadd.xlane.f32.xlu0 %v1398
        %v1400 = vpop.xlane.xlu0 %1399
        %v1401 = vsel %vm619, %v1389, 0.0
        %1402 = vadd.xlane.f32.xlu0 %v1401
        %v1403 = vpop.xlane.xlu0 %1402
        %v1404 = vsel %vm619, %v1391, 0.0
        %1405 = vadd.xlane.f32.xlu0 %v1404
        %v1406 = vpop.xlane.xlu0 %1405
        %v1407 = vsel %vm619, %v1393, 0.0
        %1408 = vadd.xlane.f32.xlu0 %v1407
        %v1409 = vpop.xlane.xlu0 %1408
        %v1410 = vsel %vm619, %v1395, 0.0
        %1411 = vadd.xlane.f32.xlu0 %v1410
        %v1412 = vpop.xlane.xlu0 %1411
        %v1413 = vsel %vm619, %v1397, 0.0
        %1414 = vadd.xlane.f32.xlu0 %v1413
        %v1415 = vpop.xlane.xlu0 %1414
        %v1416 = vrcp.pop %v1400
        %v1417 = vmul.f32 %v1387, %v1416
        %v1418 = vrcp.pop %v1403
        %v1419 = vmul.f32 %v1389, %v1418
        %v1420 = vrcp.pop %v1406
        %v1421 = vmul.f32 %v1391, %v1420
        %v1422 = vrcp.pop %v1409
        %v1423 = vmul.f32 %v1393, %v1422
        %v1424 = vrcp.pop %v1412
        %v1425 = vmul.f32 %v1395, %v1424
        %v1426 = vrcp.pop %v1415
        %v1427 = vmul.f32 %v1397, %v1426
        %v1428 = vmul.f32 %v1157, %v1417
        %v1429 = vmul.f32 %v1157, %v1419
        %v1430 = vadd.f32 %v1428, 0.0
        %v1431 = vadd.f32 %v1429, 0.0
        %v1432 = vmul.f32 %v1166, %v1421
        %v1433 = vmul.f32 %v1166, %v1423
        %v1434 = vadd.f32 %v1430, %v1432
        %v1435 = vadd.f32 %v1431, %v1433
        %v1436 = vmul.f32 %v1175, %v1425
        %v1437 = vmul.f32 %v1175, %v1427
        %v1438 = vadd.f32 %v1434, %v1436
        %v1439 = vadd.f32 %v1435, %v1437
        %1442 = vrot.lane.b32.xlu0 %v789, 120
        %v1443 = vpop.permute.xlu0 %1442
        %1444 = vrot.lane.b32.xlu0 %v794, 120
        %v1445 = vpop.permute.xlu0 %1444
        %v1449 = vsel %vm619, %v1438, 0
        %v1452 = vsel %vm619, %v1439, 0
        %1454 = vmatprep.subr.mxu0 0.0
        %1455 = vmatpush1.msra.mxu0 0.0
        %1456 = vmatprep.subr.mxu0 0.0
        %1457 = vmatpush1.msra.mxu0 0.0
        %1458 = vmatprep.subr.mxu0 0.0
        %1459 = vmatpush1.msra.mxu0 0.0
        %1460 = vmatprep.subr.mxu0 0.0
        %1461 = vmatpush1.msra.mxu0 0.0
        %1462 = vmatprep.subr.mxu0 0.0
        %1463 = vmatpush1.msra.mxu0 0.0
        %1464 = vmatprep.subr.mxu0 0.0
        %1465 = vmatpush1.msra.mxu0 0.0
        %1466 = vmatprep.subr.mxu0 0.0
        %1467 = vmatpush1.msra.mxu0 0.0
        %1468 = vmatprep.subr.mxu0 0.0
        %1469 = vmatpush1.msra.mxu0 0.0
        %1470 = vmatprep.subr.mxu0 0.0
        %1471 = vmatpush1.msra.mxu0 0.0
        %1472 = vmatprep.subr.mxu0 0.0
        %1473 = vmatpush1.msra.mxu0 0.0
        %1474 = vmatprep.subr.mxu0 0.0
        %1475 = vmatpush1.msra.mxu0 0.0
        %1476 = vmatprep.subr.mxu0 0.0
        %1477 = vmatpush1.msra.mxu0 0.0
        %1478 = vmatprep.subr.mxu0 0.0
        %1479 = vmatpush1.msra.mxu0 0.0
        %1480 = vmatprep.subr.mxu0 0.0
        %1481 = vmatpush1.msra.mxu0 0.0
        %1482 = vmatprep.subr.mxu0 0.0
        %1483 = vmatpush1.msra.mxu0 %v1445
        %1484 = vmatprep.subr.mxu0 0.0
        %1485 = vmatpush1.msra.mxu0 %v1443
        %1486 = vmatprep.subr.mxu0 0.0
        %1487 = vmatpush2.msra.mxu0 0.0
        %1488 = vmatprep.subr.mxu0 0.0
        %1489 = vmatpush2.msra.mxu0 0.0
        %1490 = vmatprep.subr.mxu0 0.0
        %1491 = vmatpush2.msra.mxu0 0.0
        %1492 = vmatprep.subr.mxu0 0.0
        %1493 = vmatpush2.msra.mxu0 0.0
        %1494 = vmatprep.subr.mxu0 0.0
        %1495 = vmatpush2.msra.mxu0 0.0
        %1496 = vmatprep.subr.mxu0 0.0
        %1497 = vmatpush2.msra.mxu0 0.0
        %1498 = vmatprep.subr.mxu0 0.0
        %1499 = vmatpush2.msra.mxu0 0.0
        %1500 = vmatprep.subr.mxu0 0.0
        %1501 = vmatpush2.msra.mxu0 0.0
        %1502 = vmatprep.subr.mxu0 0.0
        %1503 = vmatpush2.msra.mxu0 0.0
        %1504 = vmatprep.subr.mxu0 0.0
        %1505 = vmatpush2.msra.mxu0 0.0
        %1506 = vmatprep.subr.mxu0 0.0
        %1507 = vmatpush2.msra.mxu0 0.0
        %1508 = vmatprep.subr.mxu0 0.0
        %1509 = vmatpush2.msra.mxu0 0.0
        %1510 = vmatprep.subr.mxu0 0.0
        %1511 = vmatpush2.msra.mxu0 0.0
        %1512 = vmatprep.subr.mxu0 0.0
        %1513 = vmatpush2.msra.mxu0 0.0
        %1514 = vmatprep.subr.mxu0 0.0
        %1515 = vmatpush2.msra.mxu0 0.0
        %1516 = vmatprep.subr.mxu0 0.0
        %1517 = vmatpush2.msra.mxu0 0.0
        %1518 = vmatprep.mubr.f32.mxu0 0.0
        %1519 = vmatmul.mubr.f32.gmra.mxu0 %v1449
        %v1520 = vpop.f32.mrf.mxu0
        %v1521 = vadd.f32 0.0, %v1520
        %v1522 = vpop.f32.mrf.mxu0
        %1523 = vmatprep.mubr.f32.mxu0 0.0
        %1524 = vmatmul.mubr.f32.gmra.mxu0 %v1452
        %v1525 = vpop.f32.mrf.mxu0
        %v1526 = vadd.f32 0.0, %v1525
        %v1527 = vpop.f32.mrf.mxu0
        %1528 = vdwg.mxu0
        %v1529 = vld [vmem:[#allocation8 + $0x8] sm:$0xff]
        %v1531 = vsel %vm993, %v1521, 0
        %v1534 = vsel %vm993, %v1526, 0
        %1536 = vmatprep.subr.mxu0 0.0
        %1537 = vmatpush1.msra.mxu0 0.0
        %1538 = vmatprep.subr.mxu0 0.0
        %1539 = vmatpush1.msra.mxu0 0.0
        %1540 = vmatprep.subr.mxu0 0.0
        %1541 = vmatpush1.msra.mxu0 0.0
        %1542 = vmatprep.subr.mxu0 0.0
        %1543 = vmatpush1.msra.mxu0 0.0
        %1544 = vmatprep.subr.mxu0 0.0
        %1545 = vmatpush1.msra.mxu0 0.0
        %1546 = vmatprep.subr.mxu0 0.0
        %1547 = vmatpush1.msra.mxu0 0.0
        %1548 = vmatprep.subr.mxu0 0.0
        %1549 = vmatpush1.msra.mxu0 0.0
        %1550 = vmatprep.subr.mxu0 0.0
        %1551 = vmatpush1.msra.mxu0 0.0
        %1552 = vmatprep.subr.mxu0 0.0
        %1553 = vmatpush1.msra.mxu0 0.0
        %1554 = vmatprep.subr.mxu0 0.0
        %1555 = vmatpush1.msra.mxu0 0.0
        %1556 = vmatprep.subr.mxu0 0.0
        %1557 = vmatpush1.msra.mxu0 0.0
        %1558 = vmatprep.subr.mxu0 0.0
        %1559 = vmatpush1.msra.mxu0 0.0
        %1560 = vmatprep.subr.mxu0 0.0
        %1561 = vmatpush1.msra.mxu0 0.0
        %1562 = vmatprep.subr.mxu0 0.0
        %1563 = vmatpush1.msra.mxu0 0.0
        %1564 = vmatprep.subr.mxu0 0.0
        %1565 = vmatpush1.msra.mxu0 0.0
        %1566 = vmatprep.subr.mxu0 0.0
        %1567 = vmatpush1.msra.mxu0 %v1529
        %1568 = vmatprep.subr.mxu0 0.0
        %1569 = vmatpush2.msra.mxu0 0.0
        %1570 = vmatprep.subr.mxu0 0.0
        %1571 = vmatpush2.msra.mxu0 0.0
        %1572 = vmatprep.subr.mxu0 0.0
        %1573 = vmatpush2.msra.mxu0 0.0
        %1574 = vmatprep.subr.mxu0 0.0
        %1575 = vmatpush2.msra.mxu0 0.0
        %1576 = vmatprep.subr.mxu0 0.0
        %1577 = vmatpush2.msra.mxu0 0.0
        %1578 = vmatprep.subr.mxu0 0.0
        %1579 = vmatpush2.msra.mxu0 0.0
        %1580 = vmatprep.subr.mxu0 0.0
        %1581 = vmatpush2.msra.mxu0 0.0
        %1582 = vmatprep.subr.mxu0 0.0
        %1583 = vmatpush2.msra.mxu0 0.0
        %1584 = vmatprep.subr.mxu0 0.0
        %1585 = vmatpush2.msra.mxu0 0.0
        %1586 = vmatprep.subr.mxu0 0.0
        %1587 = vmatpush2.msra.mxu0 0.0
        %1588 = vmatprep.subr.mxu0 0.0
        %1589 = vmatpush2.msra.mxu0 0.0
        %1590 = vmatprep.subr.mxu0 0.0
        %1591 = vmatpush2.msra.mxu0 0.0
        %1592 = vmatprep.subr.mxu0 0.0
        %1593 = vmatpush2.msra.mxu0 0.0
        %1594 = vmatprep.subr.mxu0 0.0
        %1595 = vmatpush2.msra.mxu0 0.0
        %1596 = vmatprep.subr.mxu0 0.0
        %1597 = vmatpush2.msra.mxu0 0.0
        %1598 = vmatprep.subr.mxu0 0.0
        %1599 = vmatpush2.msra.mxu0 0.0
        %1600 = vmatprep.mubr.f32.mxu0 0.0
        %1601 = vmatmul.mubr.f32.gmra.mxu0 %v1531
        %v1602 = vpop.f32.mrf.mxu0
        %v1603 = vadd.f32 0.0, %v1602
        %v1604 = vpop.f32.mrf.mxu0
        %1605 = vmatprep.mubr.f32.mxu0 0.0
        %1606 = vmatmul.mubr.f32.gmra.mxu0 %v1534
        %v1607 = vpop.f32.mrf.mxu0
        %v1608 = vadd.f32 0.0, %v1607
        %v1609 = vpop.f32.mrf.mxu0
        %1610 = vdwg.mxu0
        %v1612 = vsel %vm993, %v1254, 0
        %v1615 = vsel %vm993, %v1259, 0
        %1617 = vmatprep.subr.mxu0 0.0
        %1618 = vmatpush1.msra.mxu0 0.0
        %1619 = vmatprep.subr.mxu0 0.0
        %1620 = vmatpush1.msra.mxu0 0.0
        %1621 = vmatprep.subr.mxu0 0.0
        %1622 = vmatpush1.msra.mxu0 0.0
        %1623 = vmatprep.subr.mxu0 0.0
        %1624 = vmatpush1.msra.mxu0 0.0
        %1625 = vmatprep.subr.mxu0 0.0
        %1626 = vmatpush1.msra.mxu0 0.0
        %1627 = vmatprep.subr.mxu0 0.0
        %1628 = vmatpush1.msra.mxu0 0.0
        %1629 = vmatprep.subr.mxu0 0.0
        %1630 = vmatpush1.msra.mxu0 0.0
        %1631 = vmatprep.subr.mxu0 0.0
        %1632 = vmatpush1.msra.mxu0 0.0
        %1633 = vmatprep.subr.mxu0 0.0
        %1634 = vmatpush1.msra.mxu0 0.0
        %1635 = vmatprep.subr.mxu0 0.0
        %1636 = vmatpush1.msra.mxu0 0.0
        %1637 = vmatprep.subr.mxu0 0.0
        %1638 = vmatpush1.msra.mxu0 0.0
        %1639 = vmatprep.subr.mxu0 0.0
        %1640 = vmatpush1.msra.mxu0 0.0
        %1641 = vmatprep.subr.mxu0 0.0
        %1642 = vmatpush1.msra.mxu0 0.0
        %1643 = vmatprep.subr.mxu0 0.0
        %1644 = vmatpush1.msra.mxu0 0.0
        %1645 = vmatprep.subr.mxu0 0.0
        %1646 = vmatpush1.msra.mxu0 0.0
        %1647 = vmatprep.subr.mxu0 0.0
        %1648 = vmatpush1.msra.mxu0 %v1262
        %1649 = vmatprep.subr.mxu0 0.0
        %1650 = vmatpush2.msra.mxu0 0.0
        %1651 = vmatprep.subr.mxu0 0.0
        %1652 = vmatpush2.msra.mxu0 0.0
        %1653 = vmatprep.subr.mxu0 0.0
        %1654 = vmatpush2.msra.mxu0 0.0
        %1655 = vmatprep.subr.mxu0 0.0
        %1656 = vmatpush2.msra.mxu0 0.0
        %1657 = vmatprep.subr.mxu0 0.0
        %1658 = vmatpush2.msra.mxu0 0.0
        %1659 = vmatprep.subr.mxu0 0.0
        %1660 = vmatpush2.msra.mxu0 0.0
        %1661 = vmatprep.subr.mxu0 0.0
        %1662 = vmatpush2.msra.mxu0 0.0
        %1663 = vmatprep.subr.mxu0 0.0
        %1664 = vmatpush2.msra.mxu0 0.0
        %1665 = vmatprep.subr.mxu0 0.0
        %1666 = vmatpush2.msra.mxu0 0.0
        %1667 = vmatprep.subr.mxu0 0.0
        %1668 = vmatpush2.msra.mxu0 0.0
        %1669 = vmatprep.subr.mxu0 0.0
        %1670 = vmatpush2.msra.mxu0 0.0
        %1671 = vmatprep.subr.mxu0 0.0
        %1672 = vmatpush2.msra.mxu0 0.0
        %1673 = vmatprep.subr.mxu0 0.0
        %1674 = vmatpush2.msra.mxu0 0.0
        %1675 = vmatprep.subr.mxu0 0.0
        %1676 = vmatpush2.msra.mxu0 0.0
        %1677 = vmatprep.subr.mxu0 0.0
        %1678 = vmatpush2.msra.mxu0 0.0
        %1679 = vmatprep.subr.mxu0 0.0
        %1680 = vmatpush2.msra.mxu0 0.0
        %1681 = vmatprep.mubr.f32.mxu0 0.0
        %1682 = vmatmul.mubr.f32.gmra.mxu0 %v1612
        %v1683 = vpop.f32.mrf.mxu0
        %v1684 = vadd.f32 %v1603, %v1683
        %v1685 = vpop.f32.mrf.mxu0
        %1686 = vmatprep.mubr.f32.mxu0 0.0
        %1687 = vmatmul.mubr.f32.gmra.mxu0 %v1615
        %v1688 = vpop.f32.mrf.mxu0
        %v1689 = vadd.f32 %v1608, %v1688
        %v1690 = vpop.f32.mrf.mxu0
        %1691 = vdwg.mxu0
        %1692 = vrot.lane.b32.xlu0 %v985, 112
        %v1693 = vpop.permute.xlu0 %1692
        %1694 = vrot.lane.b32.xlu0 %v990, 112
        %v1695 = vpop.permute.xlu0 %1694
        %1696 = vrot.lane.b32.xlu0 %v889, 112
        %v1697 = vpop.permute.xlu0 %1696
        %1698 = vrot.lane.b32.xlu0 %v894, 112
        %v1699 = vpop.permute.xlu0 %1698
        %v1700 = vsel %vm993, %v1693, 0
        %v1702 = vsel %vm993, %v1695, 0
        %v1704 = vsel %vm993, %v1697, 0
        %v1706 = vsel %vm993, %v1699, 0
        %1708 = vmatprep.subr.mxu0 0.0
        %1709 = vmatpush1.xpose.msra.mxu0 0.0
        %1710 = vmatprep.subr.mxu0 0.0
        %1711 = vmatpush1.xpose.msra.mxu0 0.0
        %1712 = vmatprep.subr.mxu0 0.0
        %1713 = vmatpush1.xpose.msra.mxu0 0.0
        %1714 = vmatprep.subr.mxu0 0.0
        %1715 = vmatpush1.xpose.msra.mxu0 0.0
        %1716 = vmatprep.subr.mxu0 0.0
        %1717 = vmatpush1.xpose.msra.mxu0 0.0
        %1718 = vmatprep.subr.mxu0 0.0
        %1719 = vmatpush1.xpose.msra.mxu0 0.0
        %1720 = vmatprep.subr.mxu0 0.0
        %1721 = vmatpush1.xpose.msra.mxu0 0.0
        %1722 = vmatprep.subr.mxu0 0.0
        %1723 = vmatpush1.xpose.msra.mxu0 0.0
        %1724 = vmatprep.subr.mxu0 0.0
        %1725 = vmatpush1.xpose.msra.mxu0 0.0
        %1726 = vmatprep.subr.mxu0 0.0
        %1727 = vmatpush1.xpose.msra.mxu0 0.0
        %1728 = vmatprep.subr.mxu0 0.0
        %1729 = vmatpush1.xpose.msra.mxu0 0.0
        %1730 = vmatprep.subr.mxu0 0.0
        %1731 = vmatpush1.xpose.msra.mxu0 0.0
        %1732 = vmatprep.subr.mxu0 0.0
        %1733 = vmatpush1.xpose.msra.mxu0 0.0
        %1734 = vmatprep.subr.mxu0 0.0
        %1735 = vmatpush1.xpose.msra.mxu0 0.0
        %1736 = vmatprep.subr.mxu0 0.0
        %1737 = vmatpush1.xpose.msra.mxu0 %v1706
        %1738 = vmatprep.subr.mxu0 0.0
        %1739 = vmatpush1.xpose.msra.mxu0 %v1704
        %1740 = vmatprep.subr.mxu0 0.0
        %1741 = vmatpush2.xpose.msra.mxu0 0.0
        %1742 = vmatprep.subr.mxu0 0.0
        %1743 = vmatpush2.xpose.msra.mxu0 0.0
        %1744 = vmatprep.subr.mxu0 0.0
        %1745 = vmatpush2.xpose.msra.mxu0 0.0
        %1746 = vmatprep.subr.mxu0 0.0
        %1747 = vmatpush2.xpose.msra.mxu0 0.0
        %1748 = vmatprep.subr.mxu0 0.0
        %1749 = vmatpush2.xpose.msra.mxu0 0.0
        %1750 = vmatprep.subr.mxu0 0.0
        %1751 = vmatpush2.xpose.msra.mxu0 0.0
        %1752 = vmatprep.subr.mxu0 0.0
        %1753 = vmatpush2.xpose.msra.mxu0 0.0
        %1754 = vmatprep.subr.mxu0 0.0
        %1755 = vmatpush2.xpose.msra.mxu0 0.0
        %1756 = vmatprep.subr.mxu0 0.0
        %1757 = vmatpush2.xpose.msra.mxu0 0.0
        %1758 = vmatprep.subr.mxu0 0.0
        %1759 = vmatpush2.xpose.msra.mxu0 0.0
        %1760 = vmatprep.subr.mxu0 0.0
        %1761 = vmatpush2.xpose.msra.mxu0 0.0
        %1762 = vmatprep.subr.mxu0 0.0
        %1763 = vmatpush2.xpose.msra.mxu0 0.0
        %1764 = vmatprep.subr.mxu0 0.0
        %1765 = vmatpush2.xpose.msra.mxu0 0.0
        %1766 = vmatprep.subr.mxu0 0.0
        %1767 = vmatpush2.xpose.msra.mxu0 0.0
        %1768 = vmatprep.subr.mxu0 0.0
        %1769 = vmatpush2.xpose.msra.mxu0 0.0
        %1770 = vmatprep.subr.mxu0 0.0
        %1771 = vmatpush2.xpose.msra.mxu0 0.0
        %1772 = vmatprep.mubr.f32.mxu0 0.0
        %1773 = vmatmul.mubr.f32.gmra.mxu0 %v1700
        %v1774 = vpop.f32.mrf.mxu0
        %v1775 = vadd.f32 0.0, %v1774
        %v1776 = vpop.f32.mrf.mxu0
        %1777 = vmatprep.mubr.f32.mxu0 0.0
        %1778 = vmatmul.mubr.f32.gmra.mxu0 %v1702
        %v1779 = vpop.f32.mrf.mxu0
        %v1780 = vadd.f32 0.0, %v1779
        %v1781 = vpop.f32.mrf.mxu0
        %1782 = vdwg.mxu0
        %v1783 = vmul.f32 %v1775, 0.35355338
        %v1784 = vmul.f32 %v1780, 0.35355338
        %v1785 = vadd.f32 %v1783, %v520
        %v1786 = vadd.f32 %v1784, %v521
        %v1787 = vadd.f32 %v1783, %v522
        %v1788 = vadd.f32 %v1784, %v523
        %v1789 = vadd.f32 %v1783, %v524
        %v1790 = vadd.f32 %v1784, %v525
        %v1791 = vsel %vm619, %v1785, -inf
        %1792 = vmax.xlane.f32.xlu0 %v1791
        %v1793 = vpop.xlane.xlu0 %1792
        %v1794 = vsel %vm619, %v1786, -inf
        %1795 = vmax.xlane.f32.xlu0 %v1794
        %v1796 = vpop.xlane.xlu0 %1795
        %v1797 = vsel %vm619, %v1787, -inf
        %1798 = vmax.xlane.f32.xlu0 %v1797
        %v1799 = vpop.xlane.xlu0 %1798
        %v1800 = vsel %vm619, %v1788, -inf
        %1801 = vmax.xlane.f32.xlu0 %v1800
        %v1802 = vpop.xlane.xlu0 %1801
        %v1803 = vsel %vm619, %v1789, -inf
        %1804 = vmax.xlane.f32.xlu0 %v1803
        %v1805 = vpop.xlane.xlu0 %1804
        %v1806 = vsel %vm619, %v1790, -inf
        %1807 = vmax.xlane.f32.xlu0 %v1806
        %v1808 = vpop.xlane.xlu0 %1807
        %v1809 = vsub.f32 %v1785, %v1793
        %v1810 = vsub.f32 %v1786, %v1796
        %v1811 = vsub.f32 %v1787, %v1799
        %v1812 = vsub.f32 %v1788, %v1802
        %v1813 = vsub.f32 %v1789, %v1805
        %v1814 = vsub.f32 %v1790, %v1808
        %v1815 = vmul.f32 %v1809, 1.442695
        %v1816 = vpow.pop %v1815
        %v1817 = vmul.f32 %v1810, 1.442695
        %v1818 = vpow.pop %v1817
        %v1819 = vmul.f32 %v1811, 1.442695
        %v1820 = vpow.pop %v1819
        %v1821 = vmul.f32 %v1812, 1.442695
        %v1822 = vpow.pop %v1821
        %v1823 = vmul.f32 %v1813, 1.442695
        %v1824 = vpow.pop %v1823
        %v1825 = vmul.f32 %v1814, 1.442695
        %v1826 = vpow.pop %v1825
        %v1827 = vsel %vm619, %v1816, 0.0
        %1828 = vadd.xlane.f32.xlu0 %v1827
        %v1829 = vpop.xlane.xlu0 %1828
        %v1830 = vsel %vm619, %v1818, 0.0
        %1831 = vadd.xlane.f32.xlu0 %v1830
        %v1832 = vpop.xlane.xlu0 %1831
        %v1833 = vsel %vm619, %v1820, 0.0
        %1834 = vadd.xlane.f32.xlu0 %v1833
        %v1835 = vpop.xlane.xlu0 %1834
        %v1836 = vsel %vm619, %v1822, 0.0
        %1837 = vadd.xlane.f32.xlu0 %v1836
        %v1838 = vpop.xlane.xlu0 %1837
        %v1839 = vsel %vm619, %v1824, 0.0
        %1840 = vadd.xlane.f32.xlu0 %v1839
        %v1841 = vpop.xlane.xlu0 %1840
        %v1842 = vsel %vm619, %v1826, 0.0
        %1843 = vadd.xlane.f32.xlu0 %v1842
        %v1844 = vpop.xlane.xlu0 %1843
        %v1845 = vrcp.pop %v1829
        %v1846 = vmul.f32 %v1816, %v1845
        %v1847 = vrcp.pop %v1832
        %v1848 = vmul.f32 %v1818, %v1847
        %v1849 = vrcp.pop %v1835
        %v1850 = vmul.f32 %v1820, %v1849
        %v1851 = vrcp.pop %v1838
        %v1852 = vmul.f32 %v1822, %v1851
        %v1853 = vrcp.pop %v1841
        %v1854 = vmul.f32 %v1824, %v1853
        %v1855 = vrcp.pop %v1844
        %v1856 = vmul.f32 %v1826, %v1855
        %v1857 = vmul.f32 %v1157, %v1846
        %v1858 = vmul.f32 %v1157, %v1848
        %v1859 = vadd.f32 %v1857, 0.0
        %v1860 = vadd.f32 %v1858, 0.0
        %v1861 = vmul.f32 %v1166, %v1850
        %v1862 = vmul.f32 %v1166, %v1852
        %v1863 = vadd.f32 %v1859, %v1861
        %v1864 = vadd.f32 %v1860, %v1862
        %v1865 = vmul.f32 %v1175, %v1854
        %v1866 = vmul.f32 %v1175, %v1856
        %v1867 = vadd.f32 %v1863, %v1865
        %v1868 = vadd.f32 %v1864, %v1866
        %1869 = vrot.lane.b32.xlu0 %v789, 112
        %v1870 = vpop.permute.xlu0 %1869
        %1871 = vrot.lane.b32.xlu0 %v794, 112
        %v1872 = vpop.permute.xlu0 %1871
        %v1876 = vsel %vm619, %v1867, 0
        %v1879 = vsel %vm619, %v1868, 0
        %1881 = vmatprep.subr.mxu0 0.0
        %1882 = vmatpush1.msra.mxu0 0.0
        %1883 = vmatprep.subr.mxu0 0.0
        %1884 = vmatpush1.msra.mxu0 0.0
        %1885 = vmatprep.subr.mxu0 0.0
        %1886 = vmatpush1.msra.mxu0 0.0
        %1887 = vmatprep.subr.mxu0 0.0
        %1888 = vmatpush1.msra.mxu0 0.0
        %1889 = vmatprep.subr.mxu0 0.0
        %1890 = vmatpush1.msra.mxu0 0.0
        %1891 = vmatprep.subr.mxu0 0.0
        %1892 = vmatpush1.msra.mxu0 0.0
        %1893 = vmatprep.subr.mxu0 0.0
        %1894 = vmatpush1.msra.mxu0 0.0
        %1895 = vmatprep.subr.mxu0 0.0
        %1896 = vmatpush1.msra.mxu0 0.0
        %1897 = vmatprep.subr.mxu0 0.0
        %1898 = vmatpush1.msra.mxu0 0.0
        %1899 = vmatprep.subr.mxu0 0.0
        %1900 = vmatpush1.msra.mxu0 0.0
        %1901 = vmatprep.subr.mxu0 0.0
        %1902 = vmatpush1.msra.mxu0 0.0
        %1903 = vmatprep.subr.mxu0 0.0
        %1904 = vmatpush1.msra.mxu0 0.0
        %1905 = vmatprep.subr.mxu0 0.0
        %1906 = vmatpush1.msra.mxu0 0.0
        %1907 = vmatprep.subr.mxu0 0.0
        %1908 = vmatpush1.msra.mxu0 0.0
        %1909 = vmatprep.subr.mxu0 0.0
        %1910 = vmatpush1.msra.mxu0 %v1872
        %1911 = vmatprep.subr.mxu0 0.0
        %1912 = vmatpush1.msra.mxu0 %v1870
        %1913 = vmatprep.subr.mxu0 0.0
        %1914 = vmatpush2.msra.mxu0 0.0
        %1915 = vmatprep.subr.mxu0 0.0
        %1916 = vmatpush2.msra.mxu0 0.0
        %1917 = vmatprep.subr.mxu0 0.0
        %1918 = vmatpush2.msra.mxu0 0.0
        %1919 = vmatprep.subr.mxu0 0.0
        %1920 = vmatpush2.msra.mxu0 0.0
        %1921 = vmatprep.subr.mxu0 0.0
        %1922 = vmatpush2.msra.mxu0 0.0
        %1923 = vmatprep.subr.mxu0 0.0
        %1924 = vmatpush2.msra.mxu0 0.0
        %1925 = vmatprep.subr.mxu0 0.0
        %1926 = vmatpush2.msra.mxu0 0.0
        %1927 = vmatprep.subr.mxu0 0.0
        %1928 = vmatpush2.msra.mxu0 0.0
        %1929 = vmatprep.subr.mxu0 0.0
        %1930 = vmatpush2.msra.mxu0 0.0
        %1931 = vmatprep.subr.mxu0 0.0
        %1932 = vmatpush2.msra.mxu0 0.0
        %1933 = vmatprep.subr.mxu0 0.0
        %1934 = vmatpush2.msra.mxu0 0.0
        %1935 = vmatprep.subr.mxu0 0.0
        %1936 = vmatpush2.msra.mxu0 0.0
        %1937 = vmatprep.subr.mxu0 0.0
        %1938 = vmatpush2.msra.mxu0 0.0
        %1939 = vmatprep.subr.mxu0 0.0
        %1940 = vmatpush2.msra.mxu0 0.0
        %1941 = vmatprep.subr.mxu0 0.0
        %1942 = vmatpush2.msra.mxu0 0.0
        %1943 = vmatprep.subr.mxu0 0.0
        %1944 = vmatpush2.msra.mxu0 0.0
        %1945 = vmatprep.mubr.f32.mxu0 0.0
        %1946 = vmatmul.mubr.f32.gmra.mxu0 %v1876
        %v1947 = vpop.f32.mrf.mxu0
        %v1948 = vadd.f32 0.0, %v1947
        %v1949 = vpop.f32.mrf.mxu0
        %1950 = vmatprep.mubr.f32.mxu0 0.0
        %1951 = vmatmul.mubr.f32.gmra.mxu0 %v1879
        %v1952 = vpop.f32.mrf.mxu0
        %v1953 = vadd.f32 0.0, %v1952
        %v1954 = vpop.f32.mrf.mxu0
        %1955 = vdwg.mxu0
        %v1956 = vld [vmem:[#allocation8 + $0x10] sm:$0xff]
        %v1958 = vsel %vm993, %v1948, 0
        %v1961 = vsel %vm993, %v1953, 0
        %1963 = vmatprep.subr.mxu0 0.0
        %1964 = vmatpush1.msra.mxu0 0.0
        %1965 = vmatprep.subr.mxu0 0.0
        %1966 = vmatpush1.msra.mxu0 0.0
        %1967 = vmatprep.subr.mxu0 0.0
        %1968 = vmatpush1.msra.mxu0 0.0
        %1969 = vmatprep.subr.mxu0 0.0
        %1970 = vmatpush1.msra.mxu0 0.0
        %1971 = vmatprep.subr.mxu0 0.0
        %1972 = vmatpush1.msra.mxu0 0.0
        %1973 = vmatprep.subr.mxu0 0.0
        %1974 = vmatpush1.msra.mxu0 0.0
        %1975 = vmatprep.subr.mxu0 0.0
        %1976 = vmatpush1.msra.mxu0 0.0
        %1977 = vmatprep.subr.mxu0 0.0
        %1978 = vmatpush1.msra.mxu0 0.0
        %1979 = vmatprep.subr.mxu0 0.0
        %1980 = vmatpush1.msra.mxu0 0.0
        %1981 = vmatprep.subr.mxu0 0.0
        %1982 = vmatpush1.msra.mxu0 0.0
        %1983 = vmatprep.subr.mxu0 0.0
        %1984 = vmatpush1.msra.mxu0 0.0
        %1985 = vmatprep.subr.mxu0 0.0
        %1986 = vmatpush1.msra.mxu0 0.0
        %1987 = vmatprep.subr.mxu0 0.0
        %1988 = vmatpush1.msra.mxu0 0.0
        %1989 = vmatprep.subr.mxu0 0.0
        %1990 = vmatpush1.msra.mxu0 0.0
        %1991 = vmatprep.subr.mxu0 0.0
        %1992 = vmatpush1.msra.mxu0 0.0
        %1993 = vmatprep.subr.mxu0 0.0
        %1994 = vmatpush1.msra.mxu0 %v1956
        %1995 = vmatprep.subr.mxu0 0.0
        %1996 = vmatpush2.msra.mxu0 0.0
        %1997 = vmatprep.subr.mxu0 0.0
        %1998 = vmatpush2.msra.mxu0 0.0
        %1999 = vmatprep.subr.mxu0 0.0
        %2000 = vmatpush2.msra.mxu0 0.0
        %2001 = vmatprep.subr.mxu0 0.0
        %2002 = vmatpush2.msra.mxu0 0.0
        %2003 = vmatprep.subr.mxu0 0.0
        %2004 = vmatpush2.msra.mxu0 0.0
        %2005 = vmatprep.subr.mxu0 0.0
        %2006 = vmatpush2.msra.mxu0 0.0
        %2007 = vmatprep.subr.mxu0 0.0
        %2008 = vmatpush2.msra.mxu0 0.0
        %2009 = vmatprep.subr.mxu0 0.0
        %2010 = vmatpush2.msra.mxu0 0.0
        %2011 = vmatprep.subr.mxu0 0.0
        %2012 = vmatpush2.msra.mxu0 0.0
        %2013 = vmatprep.subr.mxu0 0.0
        %2014 = vmatpush2.msra.mxu0 0.0
        %2015 = vmatprep.subr.mxu0 0.0
        %2016 = vmatpush2.msra.mxu0 0.0
        %2017 = vmatprep.subr.mxu0 0.0
        %2018 = vmatpush2.msra.mxu0 0.0
        %2019 = vmatprep.subr.mxu0 0.0
        %2020 = vmatpush2.msra.mxu0 0.0
        %2021 = vmatprep.subr.mxu0 0.0
        %2022 = vmatpush2.msra.mxu0 0.0
        %2023 = vmatprep.subr.mxu0 0.0
        %2024 = vmatpush2.msra.mxu0 0.0
        %2025 = vmatprep.subr.mxu0 0.0
        %2026 = vmatpush2.msra.mxu0 0.0
        %2027 = vmatprep.mubr.f32.mxu0 0.0
        %2028 = vmatmul.mubr.f32.gmra.mxu0 %v1958
        %v2029 = vpop.f32.mrf.mxu0
        %v2030 = vadd.f32 0.0, %v2029
        %v2031 = vpop.f32.mrf.mxu0
        %2032 = vmatprep.mubr.f32.mxu0 0.0
        %2033 = vmatmul.mubr.f32.gmra.mxu0 %v1961
        %v2034 = vpop.f32.mrf.mxu0
        %v2035 = vadd.f32 0.0, %v2034
        %v2036 = vpop.f32.mrf.mxu0
        %2037 = vdwg.mxu0
        %v2038 = vadd.f32 %v1684, %v2030
        %v2039 = vadd.f32 %v1689, %v2035
        %2040 = vrot.lane.b32.xlu0 %v985, 104
        %v2041 = vpop.permute.xlu0 %2040
        %2042 = vrot.lane.b32.xlu0 %v990, 104
        %v2043 = vpop.permute.xlu0 %2042
        %2044 = vrot.lane.b32.xlu0 %v889, 104
        %v2045 = vpop.permute.xlu0 %2044
        %2046 = vrot.lane.b32.xlu0 %v894, 104
        %v2047 = vpop.permute.xlu0 %2046
        %v2048 = vsel %vm993, %v2041, 0
        %v2050 = vsel %vm993, %v2043, 0
        %v2052 = vsel %vm993, %v2045, 0
        %v2054 = vsel %vm993, %v2047, 0
        %2056 = vmatprep.subr.mxu0 0.0
        %2057 = vmatpush1.xpose.msra.mxu0 0.0
        %2058 = vmatprep.subr.mxu0 0.0
        %2059 = vmatpush1.xpose.msra.mxu0 0.0
        %2060 = vmatprep.subr.mxu0 0.0
        %2061 = vmatpush1.xpose.msra.mxu0 0.0
        %2062 = vmatprep.subr.mxu0 0.0
        %2063 = vmatpush1.xpose.msra.mxu0 0.0
        %2064 = vmatprep.subr.mxu0 0.0
        %2065 = vmatpush1.xpose.msra.mxu0 0.0
        %2066 = vmatprep.subr.mxu0 0.0
        %2067 = vmatpush1.xpose.msra.mxu0 0.0
        %2068 = vmatprep.subr.mxu0 0.0
        %2069 = vmatpush1.xpose.msra.mxu0 0.0
        %2070 = vmatprep.subr.mxu0 0.0
        %2071 = vmatpush1.xpose.msra.mxu0 0.0
        %2072 = vmatprep.subr.mxu0 0.0
        %2073 = vmatpush1.xpose.msra.mxu0 0.0
        %2074 = vmatprep.subr.mxu0 0.0
        %2075 = vmatpush1.xpose.msra.mxu0 0.0
        %2076 = vmatprep.subr.mxu0 0.0
        %2077 = vmatpush1.xpose.msra.mxu0 0.0
        %2078 = vmatprep.subr.mxu0 0.0
        %2079 = vmatpush1.xpose.msra.mxu0 0.0
        %2080 = vmatprep.subr.mxu0 0.0
        %2081 = vmatpush1.xpose.msra.mxu0 0.0
        %2082 = vmatprep.subr.mxu0 0.0
        %2083 = vmatpush1.xpose.msra.mxu0 0.0
        %2084 = vmatprep.subr.mxu0 0.0
        %2085 = vmatpush1.xpose.msra.mxu0 %v2054
        %2086 = vmatprep.subr.mxu0 0.0
        %2087 = vmatpush1.xpose.msra.mxu0 %v2052
        %2088 = vmatprep.subr.mxu0 0.0
        %2089 = vmatpush2.xpose.msra.mxu0 0.0
        %2090 = vmatprep.subr.mxu0 0.0
        %2091 = vmatpush2.xpose.msra.mxu0 0.0
        %2092 = vmatprep.subr.mxu0 0.0
        %2093 = vmatpush2.xpose.msra.mxu0 0.0
        %2094 = vmatprep.subr.mxu0 0.0
        %2095 = vmatpush2.xpose.msra.mxu0 0.0
        %2096 = vmatprep.subr.mxu0 0.0
        %2097 = vmatpush2.xpose.msra.mxu0 0.0
        %2098 = vmatprep.subr.mxu0 0.0
        %2099 = vmatpush2.xpose.msra.mxu0 0.0
        %2100 = vmatprep.subr.mxu0 0.0
        %2101 = vmatpush2.xpose.msra.mxu0 0.0
        %2102 = vmatprep.subr.mxu0 0.0
        %2103 = vmatpush2.xpose.msra.mxu0 0.0
        %2104 = vmatprep.subr.mxu0 0.0
        %2105 = vmatpush2.xpose.msra.mxu0 0.0
        %2106 = vmatprep.subr.mxu0 0.0
        %2107 = vmatpush2.xpose.msra.mxu0 0.0
        %2108 = vmatprep.subr.mxu0 0.0
        %2109 = vmatpush2.xpose.msra.mxu0 0.0
        %2110 = vmatprep.subr.mxu0 0.0
        %2111 = vmatpush2.xpose.msra.mxu0 0.0
        %2112 = vmatprep.subr.mxu0 0.0
        %2113 = vmatpush2.xpose.msra.mxu0 0.0
        %2114 = vmatprep.subr.mxu0 0.0
        %2115 = vmatpush2.xpose.msra.mxu0 0.0
        %2116 = vmatprep.subr.mxu0 0.0
        %2117 = vmatpush2.xpose.msra.mxu0 0.0
        %2118 = vmatprep.subr.mxu0 0.0
        %2119 = vmatpush2.xpose.msra.mxu0 0.0
        %2120 = vmatprep.mubr.f32.mxu0 0.0
        %2121 = vmatmul.mubr.f32.gmra.mxu0 %v2048
        %v2122 = vpop.f32.mrf.mxu0
        %v2123 = vadd.f32 0.0, %v2122
        %v2124 = vpop.f32.mrf.mxu0
        %2125 = vmatprep.mubr.f32.mxu0 0.0
        %2126 = vmatmul.mubr.f32.gmra.mxu0 %v2050
        %v2127 = vpop.f32.mrf.mxu0
        %v2128 = vadd.f32 0.0, %v2127
        %v2129 = vpop.f32.mrf.mxu0
        %2130 = vdwg.mxu0
        %v2131 = vmul.f32 %v2123, 0.35355338
        %v2132 = vmul.f32 %v2128, 0.35355338
        %v2133 = vadd.f32 %v2131, %v520
        %v2134 = vadd.f32 %v2132, %v521
        %v2135 = vadd.f32 %v2131, %v522
        %v2136 = vadd.f32 %v2132, %v523
        %v2137 = vadd.f32 %v2131, %v524
        %v2138 = vadd.f32 %v2132, %v525
        %v2139 = vsel %vm619, %v2133, -inf
        %2140 = vmax.xlane.f32.xlu0 %v2139
        %v2141 = vpop.xlane.xlu0 %2140
        %v2142 = vsel %vm619, %v2134, -inf
        %2143 = vmax.xlane.f32.xlu0 %v2142
        %v2144 = vpop.xlane.xlu0 %2143
        %v2145 = vsel %vm619, %v2135, -inf
        %2146 = vmax.xlane.f32.xlu0 %v2145
        %v2147 = vpop.xlane.xlu0 %2146
        %v2148 = vsel %vm619, %v2136, -inf
        %2149 = vmax.xlane.f32.xlu0 %v2148
        %v2150 = vpop.xlane.xlu0 %2149
        %v2151 = vsel %vm619, %v2137, -inf
        %2152 = vmax.xlane.f32.xlu0 %v2151
        %v2153 = vpop.xlane.xlu0 %2152
        %v2154 = vsel %vm619, %v2138, -inf
        %2155 = vmax.xlane.f32.xlu0 %v2154
        %v2156 = vpop.xlane.xlu0 %2155
        %v2157 = vsub.f32 %v2133, %v2141
        %v2158 = vsub.f32 %v2134, %v2144
        %v2159 = vsub.f32 %v2135, %v2147
        %v2160 = vsub.f32 %v2136, %v2150
        %v2161 = vsub.f32 %v2137, %v2153
        %v2162 = vsub.f32 %v2138, %v2156
        %v2163 = vmul.f32 %v2157, 1.442695
        %v2164 = vpow.pop %v2163
        %v2165 = vmul.f32 %v2158, 1.442695
        %v2166 = vpow.pop %v2165
        %v2167 = vmul.f32 %v2159, 1.442695
        %v2168 = vpow.pop %v2167
        %v2169 = vmul.f32 %v2160, 1.442695
        %v2170 = vpow.pop %v2169
        %v2171 = vmul.f32 %v2161, 1.442695
        %v2172 = vpow.pop %v2171
        %v2173 = vmul.f32 %v2162, 1.442695
        %v2174 = vpow.pop %v2173
        %v2175 = vsel %vm619, %v2164, 0.0
        %2176 = vadd.xlane.f32.xlu0 %v2175
        %v2177 = vpop.xlane.xlu0 %2176
        %v2178 = vsel %vm619, %v2166, 0.0
        %2179 = vadd.xlane.f32.xlu0 %v2178
        %v2180 = vpop.xlane.xlu0 %2179
        %v2181 = vsel %vm619, %v2168, 0.0
        %2182 = vadd.xlane.f32.xlu0 %v2181
        %v2183 = vpop.xlane.xlu0 %2182
        %v2184 = vsel %vm619, %v2170, 0.0
        %2185 = vadd.xlane.f32.xlu0 %v2184
        %v2186 = vpop.xlane.xlu0 %2185
        %v2187 = vsel %vm619, %v2172, 0.0
        %2188 = vadd.xlane.f32.xlu0 %v2187
        %v2189 = vpop.xlane.xlu0 %2188
        %v2190 = vsel %vm619, %v2174, 0.0
        %2191 = vadd.xlane.f32.xlu0 %v2190
        %v2192 = vpop.xlane.xlu0 %2191
        %v2193 = vrcp.pop %v2177
        %v2194 = vmul.f32 %v2164, %v2193
        %v2195 = vrcp.pop %v2180
        %v2196 = vmul.f32 %v2166, %v2195
        %v2197 = vrcp.pop %v2183
        %v2198 = vmul.f32 %v2168, %v2197
        %v2199 = vrcp.pop %v2186
        %v2200 = vmul.f32 %v2170, %v2199
        %v2201 = vrcp.pop %v2189
        %v2202 = vmul.f32 %v2172, %v2201
        %v2203 = vrcp.pop %v2192
        %v2204 = vmul.f32 %v2174, %v2203
        %v2205 = vmul.f32 %v1157, %v2194
        %v2206 = vmul.f32 %v1157, %v2196
        %v2207 = vadd.f32 %v2205, 0.0
        %v2208 = vadd.f32 %v2206, 0.0
        %v2209 = vmul.f32 %v1166, %v2198
        %v2210 = vmul.f32 %v1166, %v2200
        %v2211 = vadd.f32 %v2207, %v2209
        %v2212 = vadd.f32 %v2208, %v2210
        %v2213 = vmul.f32 %v1175, %v2202
        %v2214 = vmul.f32 %v1175, %v2204
        %v2215 = vadd.f32 %v2211, %v2213
        %v2216 = vadd.f32 %v2212, %v2214
        %2217 = vrot.lane.b32.xlu0 %v789, 104
        %v2218 = vpop.permute.xlu0 %2217
        %2219 = vrot.lane.b32.xlu0 %v794, 104
        %v2220 = vpop.permute.xlu0 %2219
        %v2224 = vsel %vm619, %v2215, 0
        %v2227 = vsel %vm619, %v2216, 0
        %2229 = vmatprep.subr.mxu0 0.0
        %2230 = vmatpush1.msra.mxu0 0.0
        %2231 = vmatprep.subr.mxu0 0.0
        %2232 = vmatpush1.msra.mxu0 0.0
        %2233 = vmatprep.subr.mxu0 0.0
        %2234 = vmatpush1.msra.mxu0 0.0
        %2235 = vmatprep.subr.mxu0 0.0
        %2236 = vmatpush1.msra.mxu0 0.0
        %2237 = vmatprep.subr.mxu0 0.0
        %2238 = vmatpush1.msra.mxu0 0.0
        %2239 = vmatprep.subr.mxu0 0.0
        %2240 = vmatpush1.msra.mxu0 0.0
        %2241 = vmatprep.subr.mxu0 0.0
        %2242 = vmatpush1.msra.mxu0 0.0
        %2243 = vmatprep.subr.mxu0 0.0
        %2244 = vmatpush1.msra.mxu0 0.0
        %2245 = vmatprep.subr.mxu0 0.0
        %2246 = vmatpush1.msra.mxu0 0.0
        %2247 = vmatprep.subr.mxu0 0.0
        %2248 = vmatpush1.msra.mxu0 0.0
        %2249 = vmatprep.subr.mxu0 0.0
        %2250 = vmatpush1.msra.mxu0 0.0
        %2251 = vmatprep.subr.mxu0 0.0
        %2252 = vmatpush1.msra.mxu0 0.0
        %2253 = vmatprep.subr.mxu0 0.0
        %2254 = vmatpush1.msra.mxu0 0.0
        %2255 = vmatprep.subr.mxu0 0.0
        %2256 = vmatpush1.msra.mxu0 0.0
        %2257 = vmatprep.subr.mxu0 0.0
        %2258 = vmatpush1.msra.mxu0 %v2220
        %2259 = vmatprep.subr.mxu0 0.0
        %2260 = vmatpush1.msra.mxu0 %v2218
        %2261 = vmatprep.subr.mxu0 0.0
        %2262 = vmatpush2.msra.mxu0 0.0
        %2263 = vmatprep.subr.mxu0 0.0
        %2264 = vmatpush2.msra.mxu0 0.0
        %2265 = vmatprep.subr.mxu0 0.0
        %2266 = vmatpush2.msra.mxu0 0.0
        %2267 = vmatprep.subr.mxu0 0.0
        %2268 = vmatpush2.msra.mxu0 0.0
        %2269 = vmatprep.subr.mxu0 0.0
        %2270 = vmatpush2.msra.mxu0 0.0
        %2271 = vmatprep.subr.mxu0 0.0
        %2272 = vmatpush2.msra.mxu0 0.0
        %2273 = vmatprep.subr.mxu0 0.0
        %2274 = vmatpush2.msra.mxu0 0.0
        %2275 = vmatprep.subr.mxu0 0.0
        %2276 = vmatpush2.msra.mxu0 0.0
        %2277 = vmatprep.subr.mxu0 0.0
        %2278 = vmatpush2.msra.mxu0 0.0
        %2279 = vmatprep.subr.mxu0 0.0
        %2280 = vmatpush2.msra.mxu0 0.0
        %2281 = vmatprep.subr.mxu0 0.0
        %2282 = vmatpush2.msra.mxu0 0.0
        %2283 = vmatprep.subr.mxu0 0.0
        %2284 = vmatpush2.msra.mxu0 0.0
        %2285 = vmatprep.subr.mxu0 0.0
        %2286 = vmatpush2.msra.mxu0 0.0
        %2287 = vmatprep.subr.mxu0 0.0
        %2288 = vmatpush2.msra.mxu0 0.0
        %2289 = vmatprep.subr.mxu0 0.0
        %2290 = vmatpush2.msra.mxu0 0.0
        %2291 = vmatprep.subr.mxu0 0.0
        %2292 = vmatpush2.msra.mxu0 0.0
        %2293 = vmatprep.mubr.f32.mxu0 0.0
        %2294 = vmatmul.mubr.f32.gmra.mxu0 %v2224
        %v2295 = vpop.f32.mrf.mxu0
        %v2296 = vadd.f32 0.0, %v2295
        %v2297 = vpop.f32.mrf.mxu0
        %2298 = vmatprep.mubr.f32.mxu0 0.0
        %2299 = vmatmul.mubr.f32.gmra.mxu0 %v2227
        %v2300 = vpop.f32.mrf.mxu0
        %v2301 = vadd.f32 0.0, %v2300
        %v2302 = vpop.f32.mrf.mxu0
        %2303 = vdwg.mxu0
        %v2304 = vld [vmem:[#allocation8 + $0x18] sm:$0xff]
        %v2306 = vsel %vm993, %v2296, 0
        %v2309 = vsel %vm993, %v2301, 0
        %2311 = vmatprep.subr.mxu0 0.0
        %2312 = vmatpush1.msra.mxu0 0.0
        %2313 = vmatprep.subr.mxu0 0.0
        %2314 = vmatpush1.msra.mxu0 0.0
        %2315 = vmatprep.subr.mxu0 0.0
        %2316 = vmatpush1.msra.mxu0 0.0
        %2317 = vmatprep.subr.mxu0 0.0
        %2318 = vmatpush1.msra.mxu0 0.0
        %2319 = vmatprep.subr.mxu0 0.0
        %2320 = vmatpush1.msra.mxu0 0.0
        %2321 = vmatprep.subr.mxu0 0.0
        %2322 = vmatpush1.msra.mxu0 0.0
        %2323 = vmatprep.subr.mxu0 0.0
        %2324 = vmatpush1.msra.mxu0 0.0
        %2325 = vmatprep.subr.mxu0 0.0
        %2326 = vmatpush1.msra.mxu0 0.0
        %2327 = vmatprep.subr.mxu0 0.0
        %2328 = vmatpush1.msra.mxu0 0.0
        %2329 = vmatprep.subr.mxu0 0.0
        %2330 = vmatpush1.msra.mxu0 0.0
        %2331 = vmatprep.subr.mxu0 0.0
        %2332 = vmatpush1.msra.mxu0 0.0
        %2333 = vmatprep.subr.mxu0 0.0
        %2334 = vmatpush1.msra.mxu0 0.0
        %2335 = vmatprep.subr.mxu0 0.0
        %2336 = vmatpush1.msra.mxu0 0.0
        %2337 = vmatprep.subr.mxu0 0.0
        %2338 = vmatpush1.msra.mxu0 0.0
        %2339 = vmatprep.subr.mxu0 0.0
        %2340 = vmatpush1.msra.mxu0 0.0
        %2341 = vmatprep.subr.mxu0 0.0
        %2342 = vmatpush1.msra.mxu0 %v2304
        %2343 = vmatprep.subr.mxu0 0.0
        %2344 = vmatpush2.msra.mxu0 0.0
        %2345 = vmatprep.subr.mxu0 0.0
        %2346 = vmatpush2.msra.mxu0 0.0
        %2347 = vmatprep.subr.mxu0 0.0
        %2348 = vmatpush2.msra.mxu0 0.0
        %2349 = vmatprep.subr.mxu0 0.0
        %2350 = vmatpush2.msra.mxu0 0.0
        %2351 = vmatprep.subr.mxu0 0.0
        %2352 = vmatpush2.msra.mxu0 0.0
        %2353 = vmatprep.subr.mxu0 0.0
        %2354 = vmatpush2.msra.mxu0 0.0
        %2355 = vmatprep.subr.mxu0 0.0
        %2356 = vmatpush2.msra.mxu0 0.0
        %2357 = vmatprep.subr.mxu0 0.0
        %2358 = vmatpush2.msra.mxu0 0.0
        %2359 = vmatprep.subr.mxu0 0.0
        %2360 = vmatpush2.msra.mxu0 0.0
        %2361 = vmatprep.subr.mxu0 0.0
        %2362 = vmatpush2.msra.mxu0 0.0
        %2363 = vmatprep.subr.mxu0 0.0
        %2364 = vmatpush2.msra.mxu0 0.0
        %2365 = vmatprep.subr.mxu0 0.0
        %2366 = vmatpush2.msra.mxu0 0.0
        %2367 = vmatprep.subr.mxu0 0.0
        %2368 = vmatpush2.msra.mxu0 0.0
        %2369 = vmatprep.subr.mxu0 0.0
        %2370 = vmatpush2.msra.mxu0 0.0
        %2371 = vmatprep.subr.mxu0 0.0
        %2372 = vmatpush2.msra.mxu0 0.0
        %2373 = vmatprep.subr.mxu0 0.0
        %2374 = vmatpush2.msra.mxu0 0.0
        %2375 = vmatprep.mubr.f32.mxu0 0.0
        %2376 = vmatmul.mubr.f32.gmra.mxu0 %v2306
        %v2377 = vpop.f32.mrf.mxu0
        %v2378 = vadd.f32 0.0, %v2377
        %v2379 = vpop.f32.mrf.mxu0
        %2380 = vmatprep.mubr.f32.mxu0 0.0
        %2381 = vmatmul.mubr.f32.gmra.mxu0 %v2309
        %v2382 = vpop.f32.mrf.mxu0
        %v2383 = vadd.f32 0.0, %v2382
        %v2384 = vpop.f32.mrf.mxu0
        %2385 = vdwg.mxu0
        %v2386 = vadd.f32 %v2038, %v2378
        %v2387 = vadd.f32 %v2039, %v2383
        %v2388 = vld [vmem:[%s7] sm:$0x1]
        %v2390 = vlaneseq
        %v2391 = vshrl.u32 %v2390, 7
        %v2392 = vsub.s32 0, %v2391
        %v2393 = vrot.slane %v2388, %v2392
        %v2395 = vadd.f32 %v2386, %v2393
        %v2396 = vadd.f32 %v2387, %v2393
        %2397 = vst.msk [vmem:[%s503] sm:$0xff] %vm526, %v2395
        %2398 = vst.msk [vmem:[%s503 + $0x8] sm:$0xff] %vm526, %v2396
        %s2399 = sand.u32 %s291, 1
        %s2400 = scalar_lea.sflag [#allocation4], %s2399
        %s2401 = sand.u32 %s291, 1
        %s2402 = smul.addr %s2401, 16
        %s2403 = scalar_lea.vmem [#allocation10], %s2402
        // Predicated region
        $region81: #{sa_routing_block.1} parent=63 // pred_check
          %p2404 = pneg %p301
        $region82: #{sa_routing_block.1} parent=63 // pred_check_branch
          %2406 = sbr.rel (%p2404) target = $region84
        $region83: #{sa_routing_block.1} parent=63 // pred_region
          %s2408 = ssub.s32 256, 256
          %2409 = vsyncadd %s2400, %s2408
          %s2410 = smul.addr %s32, 2
          %s2411 = smul.addr %s2410, 128
          %s2412 = scalar_lea.hbm %s11, %s2411
          %s2413 = sshll.u32 %s2403, 4
          %s2414 = int_to_ptr.vmem [resolvable:$true] %s2413
          %2419 = dma.vmem_to_hbm [thread:$0]  %s2414, 256, %s2412, %s2400, 128, 128, 8
        $region84: #{sa_routing_block.1} parent=63 // pred_fallthru
          _
      $region64: #{sa_routing_block.1} parent=5 // pred_fallthru
        _
      %p2420 = scmp.le.s32.totalorder 2, %s27
      // Predicated region
      $region85: #{sa_routing_block.1} parent=5 // pred_check
        %p2421 = pneg %p2420
      $region86: #{sa_routing_block.1} parent=5 // pred_check_branch
        %2423 = sbr.rel (%p2421) target = $region88
      $region87: #{sa_routing_block.1} parent=5 // pred_region
        %s2424 = ssub.s32 %s27, 2
        // Predicated region
        $region89: #{sa_routing_block.1} parent=87 // pred_check
          %p2425 = pneg %p307
        $region90: #{sa_routing_block.1} parent=87 // pred_check_branch
          %2427 = sbr.rel (%p2425) target = $region92
        $region91: #{sa_routing_block.1} parent=87 // pred_region
          %s2428 = sand.u32 %s292, 1
          %s2429 = scalar_lea.sflag [#allocation4], %s2428
          %s2430 = sand.u32 %s292, 1
          %s2431 = smul.addr %s2430, 16
          %s2432 = scalar_lea.vmem [#allocation10], %s2431
          %2433 = dma.done %s2429, 256
        $region92: #{sa_routing_block.1} parent=87 // pred_fallthru
          _
      $region88: #{sa_routing_block.1} parent=5 // pred_fallthru
        _
    $region6: #{sa_routing_block.1} parent=1 // loop_footer
      %s31 = sadd.s32 1, %s27
    $region7: #{sa_routing_block.1} parent=1 // loop_footer_branch
      %26 = sbr.rel target = $region3
    $region8: #{sa_routing_block.1} parent=1 // loop_exit
      _
    %2434 = vsyncpa [#allocation3], 1
    %s2435 = scalar_lea.sflag [#allocation3], 1
    %2436 = vsyncpa %s2435, 1
    %2437 = vsyncpa [#allocation6], 1
    %s2438 = scalar_lea.sflag [#allocation6], 1
    %2439 = vsyncpa %s2438, 1
    %2440 = vsyncpa [#allocation9], 1
    %2441 = vsyncpa [#allocation4], 1
    %s2442 = scalar_lea.sflag [#allocation4], 1
    %2443 = vsyncpa %s2442, 1

</llo_original>
